<compile_context>
chip_gen: v7x
topology: tpu7x:2x2x1
jax: 0.10.0
libtpu: 0.0.40
codegen_flags: <defaults>
</compile_context>

<pallas_src>
import jax
import jax.numpy as jnp
from jax.experimental import pallas as pl
from jax.experimental.pallas import tpu as pltpu

IN_FEATURES = 4 * 4 * 12   # 192
HIDDEN = 512
MID = 256
N_ACTIONS = 4
HEAD_WIDTH = 128           # fused head: val @ lane 0, adv @ lanes 1..4, zeros elsewhere
TB_MAX = 1024              # ~11 MiB VMEM footprint at TB=1024 -> fits every generation
VMEM_LIMIT_BYTES = 32 * 1024 * 1024


def _round_up(v, m):
    return ((v + m - 1) // m) * m


def _cdiv(a, b):
    return -(-a // b)


def _device_kind():
    try:
        return jax.devices()[0].device_kind.lower()
    except Exception:
        return ""


_KIND = _device_kind()
# v7x has 2 TensorCores per chip -> want grid >= 2 for medium/large batches.
_MULTI_TC = "v7" in _KIND
# bf16 VALU exists on v6e/v7x; keep the f32 ReLU ordering on v5e and older.
_BF16_RELU = ("v6" in _KIND) or ("v7" in _KIND)


def _choose_tiling(B):
    """Return (TB, n_tiles): TB multiple of 8, TB*n_tiles >= B with minimal
    padding (balanced tiles), and >= 2 tiles on multi-TensorCore chips."""
    if B <= 8:
        return 8, 1
    n = _cdiv(B, TB_MAX)
    if _MULTI_TC and B >= 256 and n < 2:
        n = 2                       # keep both v7x TensorCores busy
    tb = _round_up(_cdiv(B, n), 8)
    return tb, n


def make_agent_net_kernel(bf16_relu):
    def kernel(x_ref, w_pre_ref, b_pre_ref,
               w_va1_ref, b_va1_ref,
               w_va2_ref, b_va2_ref,
               out_ref):
        # netPre: Linear(192 -> 512) + ReLU
        h = jnp.dot(x_ref[...], w_pre_ref[...],
                    preferred_element_type=jnp.float32)
        h = h + b_pre_ref[...]                                    # f32 bias add
        if bf16_relu:   # exact: max commutes with the monotone downcast
            hb = jnp.maximum(h.astype(jnp.bfloat16), 0.0)
        else:
            hb = jnp.maximum(h, 0.0).astype(jnp.bfloat16)

        # fused netVal/netAdv first layers: one 512x512 matmul -> [hv | ha]
        hva = jnp.dot(hb, w_va1_ref[...], preferred_element_type=jnp.float32)
        hva = hva + b_va1_ref[...]
        if bf16_relu:
            hvab = jnp.maximum(hva.astype(jnp.bfloat16), 0.0)
        else:
            hvab = jnp.maximum(hva, 0.0).astype(jnp.bfloat16)

        # fused block-diagonal heads: one 512x128 matmul (lane-dense output)
        head = jnp.dot(hvab, w_va2_ref[...], preferred_element_type=jnp.float32)
        out_ref[...] = head + b_va2_ref[...]                      # (TB, 128) f32
    return kernel


def agent_net_forward(x, fused):
    """x: (B, 4, 4, 12) float -> (B, 4) float32 Q-values."""
    B = x.shape[0]
    x_flat = x.reshape(B, -1).astype(jnp.bfloat16)                # (B, 192)
    assert x_flat.shape[1] == IN_FEATURES

    TB, n_tiles = _choose_tiling(B)
    B_pad = TB * n_tiles
    # only pad batch rows (cheap, often a no-op); no lane padding at all
    x_in = x_flat if B_pad == B else jnp.pad(x_flat, ((0, B_pad - B), (0, 0)))

    const = lambda i: (0, 0)

    flops = 2 * B_pad * (IN_FEATURES * HIDDEN + HIDDEN * HIDDEN
                         + HIDDEN * HEAD_WIDTH)
    bytes_accessed = (
        2 * (IN_FEATURES * HIDDEN + HIDDEN * HIDDEN + HIDDEN * HEAD_WIDTH)  # bf16 weights
        + 4 * (HIDDEN + HIDDEN + HEAD_WIDTH)                                # f32 biases
        + 2 * B_pad * IN_FEATURES                                           # bf16 input
        + 4 * B_pad * HEAD_WIDTH)                                           # f32 output slab

    slab = pl.pallas_call(
        make_agent_net_kernel(_BF16_RELU),
        out_shape=jax.ShapeDtypeStruct((B_pad, HEAD_WIDTH), jnp.float32),
        grid=(n_tiles,),
        in_specs=[
            pl.BlockSpec((TB, IN_FEATURES), lambda i: (i, 0)),    # x tile (bf16)
            pl.BlockSpec((IN_FEATURES, HIDDEN), const),           # w_pre (bf16)
            pl.BlockSpec((1, HIDDEN), const),                     # b_pre (f32)
            pl.BlockSpec((HIDDEN, HIDDEN), const),                # w_va1 (bf16)
            pl.BlockSpec((1, HIDDEN), const),                     # b_va1 (f32)
            pl.BlockSpec((HIDDEN, HEAD_WIDTH), const),            # w_va2 (bf16)
            pl.BlockSpec((1, HEAD_WIDTH), const),                 # b_va2 (f32)
        ],
        out_specs=pl.BlockSpec((TB, HEAD_WIDTH), lambda i: (i, 0)),
        compiler_params=pltpu.CompilerParams(
            dimension_semantics=("parallel",),
            vmem_limit_bytes=VMEM_LIMIT_BYTES),
        cost_estimate=pl.CostEstimate(flops=flops, transcendentals=0,
                                      bytes_accessed=bytes_accessed),
    )(x_in,
      fused["w_pre"], fused["b_pre"],
      fused["w_va1"], fused["b_va1"],
      fused["w_va2"], fused["b_va2"])

    # split the lane-dense slab; drop batch padding BEFORE the global mean
    slab = slab[:B]
    val = slab[:, 0:1]                        # (B, 1)
    adv = slab[:, 1:1 + N_ACTIONS]            # (B, 4)
    # PyTorch semantics: adv.mean() is a scalar over the whole (B, 4) tensor
    return val + adv - jnp.mean(adv)


def init_params(key):
    """Raw f32 weights (PyTorch-like init) + fused bf16 weights for the kernel."""
    ks = jax.random.split(key, 10)

    def linear(kw, kb, fan_in, fan_out):
        bound = 1.0 / jnp.sqrt(fan_in)
        w = jax.random.uniform(kw, (fan_in, fan_out), jnp.float32, -bound, bound)
        b = jax.random.uniform(kb, (1, fan_out), jnp.float32, -bound, bound)
        return w, b

    w_pre, b_pre = linear(ks[0], ks[1], IN_FEATURES, HIDDEN)
    w_v1, b_v1 = linear(ks[2], ks[3], HIDDEN, MID)
    w_v2, b_v2 = linear(ks[4], ks[5], MID, 1)
    w_a1, b_a1 = linear(ks[6], ks[7], HIDDEN, MID)
    w_a2, b_a2 = linear(ks[8], ks[9], MID, N_ACTIONS)

    raw = dict(w_pre=w_pre, b_pre=b_pre,
               w_v1=w_v1, b_v1=b_v1, w_v2=w_v2, b_v2=b_v2,
               w_a1=w_a1, b_a1=b_a1, w_a2=w_a2, b_a2=b_a2)

    # 1) fuse branch first layers column-wise: [hv | ha]
    w_va1 = jnp.concatenate([w_v1, w_a1], axis=1)             # (512, 512)
    b_va1 = jnp.concatenate([b_v1, b_a1], axis=1)             # (1, 512)
    # 2) block-diagonal fused head: val at lane 0, adv at lanes 1..4
    w_va2 = jnp.zeros((HIDDEN, HEAD_WIDTH), jnp.float32)
    w_va2 = w_va2.at[:MID, 0:1].set(w_v2)
    w_va2 = w_va2.at[MID:, 1:1 + N_ACTIONS].set(w_a2)
    b_va2 = jnp.zeros((1, HEAD_WIDTH), jnp.float32)
    b_va2 = b_va2.at[:, 0:1].set(b_v2).at[:, 1:1 + N_ACTIONS].set(b_a2)

    fused = dict(
        w_pre=w_pre.astype(jnp.bfloat16), b_pre=b_pre,
        w_va1=w_va1.astype(jnp.bfloat16), b_va1=b_va1,
        w_va2=w_va2.astype(jnp.bfloat16), b_va2=b_va2,
    )
    # TODO(synk): for the latency-bound tiny-batch regime, quantize w_va1 to
    # int8 (v5e/v6e) / fp8 (v7x) with per-column scales folded into b_va1.
    return raw, fused


def reference_forward(x, raw):
    """Plain-JAX reference mirroring PyTorch AgentNet.forward, with the same
    bf16 rounding of matmul inputs as the kernel (weights + activations)."""
    B = x.shape[0]

    def q(a):  # bf16 round-trip, mirrors kernel's matmul-input casts
        return a.astype(jnp.bfloat16).astype(jnp.float32)

    def mm(a, w):
        return jnp.dot(q(a), q(w), precision=jax.lax.Precision.HIGHEST)

    xf = x.reshape(B, -1)
    h = jnp.maximum(mm(xf, raw["w_pre"]) + raw["b_pre"], 0.0)
    hv = jnp.maximum(mm(h, raw["w_v1"]) + raw["b_v1"], 0.0)
    val = mm(hv, raw["w_v2"]) + raw["b_v2"]
    ha = jnp.maximum(mm(h, raw["w_a1"]) + raw["b_a1"], 0.0)
    adv = mm(ha, raw["w_a2"]) + raw["b_a2"]
    return val + adv - jnp.mean(adv)


if __name__ == "__main__":
    key = jax.random.PRNGKey(0)
    k_params, k_x, k_x2 = jax.random.split(key, 3)

    raw, fused = init_params(k_params)

    # Board one-hot style input: (B, 4, 4, 12), small batch
    x = jax.random.uniform(k_x, (2, 4, 4, 12), jnp.float32)
    out = jax.block_until_ready(agent_net_forward(x, fused))
    ref = reference_forward(x, raw)
    assert out.shape == (2, N_ACTIONS)
    assert jnp.allclose(out, ref, atol=1e-3, rtol=1e-3), (out, ref)

    # also exercise the batch-padding path (B not a multiple of 8)
    x2 = jax.random.uniform(k_x2, (37, 4, 4, 12), jnp.float32)
    out2 = jax.block_until_ready(agent_net_forward(x2, fused))
    ref2 = reference_forward(x2, raw)
    assert out2.shape == (37, N_ACTIONS)
    assert jnp.allclose(out2, ref2, atol=1e-3, rtol=1e-3)

    print("KERNEL_OK")
</pallas_src>

<mosaic_0001>
module attributes {stable_mosaic.version = 11 : i64} {
  func.func @kernel(%arg0: i32, %arg1: memref<8x192xbf16, #tpu.memory_space<vmem>>, %arg2: memref<192x512xbf16, #tpu.memory_space<vmem>>, %arg3: memref<1x512xf32, #tpu.memory_space<vmem>>, %arg4: memref<512x512xbf16, #tpu.memory_space<vmem>>, %arg5: memref<1x512xf32, #tpu.memory_space<vmem>>, %arg6: memref<512x128xbf16, #tpu.memory_space<vmem>>, %arg7: memref<1x128xf32, #tpu.memory_space<vmem>>, %arg8: memref<8x128xf32, #tpu.memory_space<vmem>>) attributes {dimension_semantics = [#tpu.dimension_semantics<parallel>], iteration_bounds = array<i64: 1>, scalar_prefetch = 0 : i64, scratch_operands = 0 : i64, tpu.core_type = #tpu.core_type<tc>, window_params = [{transform_indices = @transform_0, window_bounds = array<i64: 8, 192>}, {pipeline_mode = #tpu.pipeline_mode<synchronous>, transform_indices = @transform_1, window_bounds = array<i64: 192, 512>}, {pipeline_mode = #tpu.pipeline_mode<synchronous>, transform_indices = @transform_2, window_bounds = array<i64: 1, 512>}, {pipeline_mode = #tpu.pipeline_mode<synchronous>, transform_indices = @transform_3, window_bounds = array<i64: 512, 512>}, {pipeline_mode = #tpu.pipeline_mode<synchronous>, transform_indices = @transform_4, window_bounds = array<i64: 1, 512>}, {pipeline_mode = #tpu.pipeline_mode<synchronous>, transform_indices = @transform_5, window_bounds = array<i64: 512, 128>}, {pipeline_mode = #tpu.pipeline_mode<synchronous>, transform_indices = @transform_6, window_bounds = array<i64: 1, 128>}, {transform_indices = @transform_7, window_bounds = array<i64: 8, 128>}]} {
    %c0 = arith.constant 0 : index
    %c0_0 = arith.constant 0 : index
    %0 = vector.load %arg1[%c0, %c0_0] : memref<8x192xbf16, #tpu.memory_space<vmem>>, vector<8x192xbf16>
    %c0_1 = arith.constant 0 : index
    %c0_2 = arith.constant 0 : index
    %1 = vector.load %arg2[%c0_1, %c0_2] : memref<192x512xbf16, #tpu.memory_space<vmem>>, vector<192x512xbf16>
    %cst = arith.constant dense<0.000000e+00> : vector<8x512xf32>
    %2 = tpu.matmul %0, %1, %cst {dimension_numbers = #tpu.dot_dimension_numbers<[1], [0], [0], [1], [0, 0, 1, 1], [], []>} : vector<8x192xbf16>, vector<192x512xbf16>, vector<8x512xf32> -> vector<8x512xf32>
    %c0_3 = arith.constant 0 : index
    %c0_4 = arith.constant 0 : index
    %3 = vector.load %arg3[%c0_3, %c0_4] : memref<1x512xf32, #tpu.memory_space<vmem>>, vector<1x512xf32>
    %4 = vector.broadcast %3 : vector<1x512xf32> to vector<8x512xf32>
    %5 = arith.addf %2, %4 : vector<8x512xf32>
    %cst_5 = arith.constant 0.000000e+00 : f32
    %6 = vector.broadcast %cst_5 : f32 to vector<8x512xf32>
    %7 = arith.maximumf %5, %6 : vector<8x512xf32>
    %8 = arith.truncf %7 : vector<8x512xf32> to vector<8x512xbf16>
    %c0_6 = arith.constant 0 : index
    %c0_7 = arith.constant 0 : index
    %9 = vector.load %arg4[%c0_6, %c0_7] : memref<512x512xbf16, #tpu.memory_space<vmem>>, vector<512x512xbf16>
    %cst_8 = arith.constant dense<0.000000e+00> : vector<8x512xf32>
    %10 = tpu.matmul %8, %9, %cst_8 {dimension_numbers = #tpu.dot_dimension_numbers<[1], [0], [0], [1], [0, 0, 1, 1], [], []>} : vector<8x512xbf16>, vector<512x512xbf16>, vector<8x512xf32> -> vector<8x512xf32>
    %c0_9 = arith.constant 0 : index
    %c0_10 = arith.constant 0 : index
    %11 = vector.load %arg5[%c0_9, %c0_10] : memref<1x512xf32, #tpu.memory_space<vmem>>, vector<1x512xf32>
    %12 = vector.broadcast %11 : vector<1x512xf32> to vector<8x512xf32>
    %13 = arith.addf %10, %12 : vector<8x512xf32>
    %cst_11 = arith.constant 0.000000e+00 : f32
    %14 = vector.broadcast %cst_11 : f32 to vector<8x512xf32>
    %15 = arith.maximumf %13, %14 : vector<8x512xf32>
    %16 = arith.truncf %15 : vector<8x512xf32> to vector<8x512xbf16>
    %c0_12 = arith.constant 0 : index
    %c0_13 = arith.constant 0 : index
    %17 = vector.load %arg6[%c0_12, %c0_13] : memref<512x128xbf16, #tpu.memory_space<vmem>>, vector<512x128xbf16>
    %cst_14 = arith.constant dense<0.000000e+00> : vector<8x128xf32>
    %18 = tpu.matmul %16, %17, %cst_14 {dimension_numbers = #tpu.dot_dimension_numbers<[1], [0], [0], [1], [0, 0, 1, 1], [], []>} : vector<8x512xbf16>, vector<512x128xbf16>, vector<8x128xf32> -> vector<8x128xf32>
    %c0_15 = arith.constant 0 : index
    %c0_16 = arith.constant 0 : index
    %19 = vector.load %arg7[%c0_15, %c0_16] : memref<1x128xf32, #tpu.memory_space<vmem>>, vector<1x128xf32>
    %20 = vector.broadcast %19 : vector<1x128xf32> to vector<8x128xf32>
    %21 = arith.addf %18, %20 : vector<8x128xf32>
    %c0_17 = arith.constant 0 : index
    %c0_18 = arith.constant 0 : index
    %22 = vector.load %arg8[%c0_17, %c0_18] : memref<8x128xf32, #tpu.memory_space<vmem>>, vector<8x128xf32>
    tpu.vector_store %arg8[%c0_17, %c0_18], %21 {strides = array<i32>} : memref<8x128xf32, #tpu.memory_space<vmem>>, vector<8x128xf32>,
    return
  }
  func.func @transform_0(%arg0: i32) -> (i32, i32) {
    %c0_i32 = arith.constant 0 : i32
    %c0_i32_0 = arith.constant 0 : i32
    return %arg0, %c0_i32 : i32, i32
  }
  func.func @transform_1(%arg0: i32) -> (i32, i32) {
    %c0_i32 = arith.constant 0 : i32
    %c0_i32_0 = arith.constant 0 : i32
    %c0_i32_1 = arith.constant 0 : i32
    return %c0_i32, %c0_i32_0 : i32, i32
  }
  func.func @transform_2(%arg0: i32) -> (i32, i32) {
    %c0_i32 = arith.constant 0 : i32
    %c0_i32_0 = arith.constant 0 : i32
    %c0_i32_1 = arith.constant 0 : i32
    return %c0_i32, %c0_i32_0 : i32, i32
  }
  func.func @transform_3(%arg0: i32) -> (i32, i32) {
    %c0_i32 = arith.constant 0 : i32
    %c0_i32_0 = arith.constant 0 : i32
    %c0_i32_1 = arith.constant 0 : i32
    return %c0_i32, %c0_i32_0 : i32, i32
  }
  func.func @transform_4(%arg0: i32) -> (i32, i32) {
    %c0_i32 = arith.constant 0 : i32
    %c0_i32_0 = arith.constant 0 : i32
    %c0_i32_1 = arith.constant 0 : i32
    return %c0_i32, %c0_i32_0 : i32, i32
  }
  func.func @transform_5(%arg0: i32) -> (i32, i32) {
    %c0_i32 = arith.constant 0 : i32
    %c0_i32_0 = arith.constant 0 : i32
    %c0_i32_1 = arith.constant 0 : i32
    return %c0_i32, %c0_i32_0 : i32, i32
  }
  func.func @transform_6(%arg0: i32) -> (i32, i32) {
    %c0_i32 = arith.constant 0 : i32
    %c0_i32_0 = arith.constant 0 : i32
    %c0_i32_1 = arith.constant 0 : i32
    return %c0_i32, %c0_i32_0 : i32, i32
  }
  func.func @transform_7(%arg0: i32) -> (i32, i32) {
    %c0_i32 = arith.constant 0 : i32
    %c0_i32_0 = arith.constant 0 : i32
    return %arg0, %c0_i32 : i32, i32
  }
}

</mosaic_0001>

<llo_original>
// kernel: tpu_custom_call.1
$region0: #{tpu_custom_call.1}
  #allocation0 [shape = 'u32[]', space=smem, size = 0x4, offset = 0x4, fixed_abs, tag = 'smem constant byte address 0x4 - core index']
  #allocation1 [shape = 'u32[144,128]{1,0:T(1,128)}', space=vmem, size = 0x12000, scoped, tag = 'internal scratch']
  %s0 = inlined_call_operand.hbm [shape: bf16[8,192], index: 0, kind: input, shape index: {}]
  %s1 = inlined_call_operand.hbm [shape: bf16[192,512], index: 1, kind: input, shape index: {}]
  %s2 = inlined_call_operand.vmem [shape: f32[1,512], index: 2, kind: input, shape index: {}]
  %s3 = inlined_call_operand.hbm [shape: bf16[512,512], index: 3, kind: input, shape index: {}]
  %s4 = inlined_call_operand.vmem [shape: f32[1,512], index: 4, kind: input, shape index: {}]
  %s5 = inlined_call_operand.hbm [shape: bf16[512,128], index: 5, kind: input, shape index: {}]
  %s6 = inlined_call_operand.vmem [shape: f32[1,128], index: 6, kind: input, shape index: {}]
  %s7 = inlined_call_operand.hbm [shape: f32[8,128], index: 7, kind: output, shape index: {}]
  %s8 = sld [smem:[#allocation0]]
  $region54: #{tpu_custom_call.1} parent=0
    _
  %s10 = ssub.s32 1, %s8
  %s11 = scalar_select 0, %s10, %s8
  $region1: #{tpu_custom_call.1} parent=0
    #allocation2 [shape = 'u8[4096]{0}', space=vmem, size = 0x1000, scoped, tag = 'input window, operand 0, single buffered']
    #allocation3 [shape = 's32[1]{0}', space=sflag, size = 0x4, scoped, tag = 'scoped memory for tpu_custom_call.1']
    #allocation4 [shape = 's32[1]{0}', space=sflag, size = 0x4, scoped, tag = 'scoped memory for tpu_custom_call.1']
    #allocation5 [shape = 'u8[196608]{0}', space=vmem, size = 0x30000, scoped, tag = 'input window, operand 1, single buffered']
    #allocation6 [shape = 's32[1]{0}', space=sflag, size = 0x4, scoped, tag = 'scoped memory for tpu_custom_call.1']
    #allocation7 [shape = 'u8[524288]{0}', space=vmem, size = 0x80000, scoped, tag = 'input window, operand 3, single buffered']
    #allocation8 [shape = 'u8[131072]{0}', space=vmem, size = 0x20000, scoped, tag = 'input window, operand 5, single buffered']
    #allocation9 [shape = 's32[1]{0}', space=sflag, size = 0x4, scoped, tag = 'scoped memory for tpu_custom_call.1']
    #allocation10 [shape = 'u8[4096]{0}', space=vmem, size = 0x1000, scoped, tag = 'output window, operand 0, single buffered']
    %12 = vsyncpa [#allocation3], 0
    %13 = vsyncpa [#allocation6], 0
    %14 = vsyncpa [#allocation9], 0
    %15 = vsyncpa [#allocation4], 0
    // Predicated region
    $region2: #{tpu_custom_call.1} parent=1 // pred_check
      _
    $region3: #{tpu_custom_call.1} parent=1 // pred_check_branch
      %17 = sbr.rel (0) target = $region5
    $region4: #{tpu_custom_call.1} parent=1 // pred_region
      %s19 = ssub.s32 128, 128
      %20 = vsyncadd [#allocation3], %s19
      %s22 = sshll.u32 [#allocation2], 4
      %s23 = int_to_ptr.vmem [resolvable:$true] %s22
      %25 = dma.hbm_to_vmem [thread:$0]  %s0, 128, %s23, [#allocation3]
    $region5: #{tpu_custom_call.1} parent=1 // pred_fallthru
      _
    // Predicated region
    $region6: #{tpu_custom_call.1} parent=1 // pred_check
      _
    $region7: #{tpu_custom_call.1} parent=1 // pred_check_branch
      %27 = sbr.rel (0) target = $region9
    $region8: #{tpu_custom_call.1} parent=1 // pred_region
      %s29 = ssub.s32 6144, 6144
      %30 = vsyncadd [#allocation6], %s29
      %s31 = sshll.u32 [#allocation5], 4
      %s32 = int_to_ptr.vmem [resolvable:$true] %s31
      %37 = dma.hbm_to_vmem [thread:$0]  %s1, 6144, %s32, [#allocation6], 256, 256, 16
    $region9: #{tpu_custom_call.1} parent=1 // pred_fallthru
      _
    // Predicated region
    $region10: #{tpu_custom_call.1} parent=1 // pred_check
      _
    $region11: #{tpu_custom_call.1} parent=1 // pred_check_branch
      %39 = sbr.rel (0) target = $region13
    $region12: #{tpu_custom_call.1} parent=1 // pred_region
      _
    $region13: #{tpu_custom_call.1} parent=1 // pred_fallthru
      _
    // Predicated region
    $region14: #{tpu_custom_call.1} parent=1 // pred_check
      _
    $region15: #{tpu_custom_call.1} parent=1 // pred_check_branch
      %41 = sbr.rel (0) target = $region17
    $region16: #{tpu_custom_call.1} parent=1 // pred_region
      %s43 = ssub.s32 16384, 16384
      %44 = vsyncadd [#allocation6], %s43
      %s45 = sshll.u32 [#allocation7], 4
      %s46 = int_to_ptr.vmem [resolvable:$true] %s45
      %51 = dma.hbm_to_vmem [thread:$0]  %s3, 16384, %s46, [#allocation6], 256, 256, 16
    $region17: #{tpu_custom_call.1} parent=1 // pred_fallthru
      _
    // Predicated region
    $region18: #{tpu_custom_call.1} parent=1 // pred_check
      _
    $region19: #{tpu_custom_call.1} parent=1 // pred_check_branch
      %53 = sbr.rel (0) target = $region21
    $region20: #{tpu_custom_call.1} parent=1 // pred_region
      _
    $region21: #{tpu_custom_call.1} parent=1 // pred_fallthru
      _
    // Predicated region
    $region22: #{tpu_custom_call.1} parent=1 // pred_check
      _
    $region23: #{tpu_custom_call.1} parent=1 // pred_check_branch
      %55 = sbr.rel (0) target = $region25
    $region24: #{tpu_custom_call.1} parent=1 // pred_region
      %s57 = ssub.s32 4096, 4096
      %58 = vsyncadd [#allocation9], %s57
      %s59 = sshll.u32 [#allocation8], 4
      %s60 = int_to_ptr.vmem [resolvable:$true] %s59
      %65 = dma.hbm_to_vmem [thread:$0]  %s5, 4096, %s60, [#allocation9], 64, 64, 4
    $region25: #{tpu_custom_call.1} parent=1 // pred_fallthru
      _
    // Predicated region
    $region26: #{tpu_custom_call.1} parent=1 // pred_check
      _
    $region27: #{tpu_custom_call.1} parent=1 // pred_check_branch
      %67 = sbr.rel (0) target = $region29
    $region28: #{tpu_custom_call.1} parent=1 // pred_region
      _
    $region29: #{tpu_custom_call.1} parent=1 // pred_fallthru
      _
    // Predicated region
    $region30: #{tpu_custom_call.1} parent=1 // pred_check
      _
    $region31: #{tpu_custom_call.1} parent=1 // pred_check_branch
      %69 = sbr.rel (0) target = $region33
    $region32: #{tpu_custom_call.1} parent=1 // pred_region
      %70 = dma.done [#allocation3], 128
    $region33: #{tpu_custom_call.1} parent=1 // pred_fallthru
      _
    // Predicated region
    $region34: #{tpu_custom_call.1} parent=1 // pred_check
      _
    $region35: #{tpu_custom_call.1} parent=1 // pred_check_branch
      %72 = sbr.rel (0) target = $region37
    $region36: #{tpu_custom_call.1} parent=1 // pred_region
      %73 = dma.done [#allocation6], 6144
    $region37: #{tpu_custom_call.1} parent=1 // pred_fallthru
      _
    // Predicated region
    $region38: #{tpu_custom_call.1} parent=1 // pred_check
      _
    $region39: #{tpu_custom_call.1} parent=1 // pred_check_branch
      %75 = sbr.rel (0) target = $region41
    $region40: #{tpu_custom_call.1} parent=1 // pred_region
      %76 = dma.done [#allocation6], 16384
    $region41: #{tpu_custom_call.1} parent=1 // pred_fallthru
      _
    // Predicated region
    $region42: #{tpu_custom_call.1} parent=1 // pred_check
      _
    $region43: #{tpu_custom_call.1} parent=1 // pred_check_branch
      %78 = sbr.rel (0) target = $region45
    $region44: #{tpu_custom_call.1} parent=1 // pred_region
      %79 = dma.done [#allocation9], 4096
    $region45: #{tpu_custom_call.1} parent=1 // pred_fallthru
      _
    %v81 = vld [vmem:[#allocation2] sm:$0xff]
    %v82 = vld [vmem:[#allocation5] sm:$0xff]
    %v83 = vld [vmem:[#allocation5 + $0x8] sm:$0xff]
    %v84 = vld [vmem:[#allocation5 + $0x10] sm:$0xff]
    %v85 = vld [vmem:[#allocation5 + $0x18] sm:$0xff]
    %v86 = vld [vmem:[#allocation5 + $0x20] sm:$0xff]
    %v87 = vld [vmem:[#allocation5 + $0x28] sm:$0xff]
    %v88 = vld [vmem:[#allocation5 + $0x30] sm:$0xff]
    %v89 = vld [vmem:[#allocation5 + $0x38] sm:$0xff]
    %v90 = vld [vmem:[#allocation5 + $0x40] sm:$0xff]
    %v91 = vld [vmem:[#allocation5 + $0x48] sm:$0xff]
    %v92 = vld [vmem:[#allocation5 + $0x50] sm:$0xff]
    %v93 = vld [vmem:[#allocation5 + $0x58] sm:$0xff]
    %v94 = vld [vmem:[#allocation5 + $0x60] sm:$0xff]
    %v95 = vld [vmem:[#allocation5 + $0x68] sm:$0xff]
    %v96 = vld [vmem:[#allocation5 + $0x70] sm:$0xff]
    %v97 = vld [vmem:[#allocation5 + $0x78] sm:$0xff]
    %v98 = vld [vmem:[#allocation5 + $0x80] sm:$0xff]
    %v99 = vld [vmem:[#allocation5 + $0x88] sm:$0xff]
    %v100 = vld [vmem:[#allocation5 + $0x90] sm:$0xff]
    %v101 = vld [vmem:[#allocation5 + $0x98] sm:$0xff]
    %v102 = vld [vmem:[#allocation5 + $0xa0] sm:$0xff]
    %v103 = vld [vmem:[#allocation5 + $0xa8] sm:$0xff]
    %v104 = vld [vmem:[#allocation5 + $0xb0] sm:$0xff]
    %v105 = vld [vmem:[#allocation5 + $0xb8] sm:$0xff]
    %v106 = vld [vmem:[#allocation5 + $0xc0] sm:$0xff]
    %v107 = vld [vmem:[#allocation5 + $0xc8] sm:$0xff]
    %v108 = vld [vmem:[#allocation5 + $0xd0] sm:$0xff]
    %v109 = vld [vmem:[#allocation5 + $0xd8] sm:$0xff]
    %v110 = vld [vmem:[#allocation5 + $0xe0] sm:$0xff]
    %v111 = vld [vmem:[#allocation5 + $0xe8] sm:$0xff]
    %v112 = vld [vmem:[#allocation5 + $0xf0] sm:$0xff]
    %v113 = vld [vmem:[#allocation5 + $0xf8] sm:$0xff]
    %v114 = vld [vmem:[#allocation5 + $0x100] sm:$0xff]
    %v115 = vld [vmem:[#allocation5 + $0x108] sm:$0xff]
    %v116 = vld [vmem:[#allocation5 + $0x110] sm:$0xff]
    %v117 = vld [vmem:[#allocation5 + $0x118] sm:$0xff]
    %v118 = vld [vmem:[#allocation5 + $0x120] sm:$0xff]
    %v119 = vld [vmem:[#allocation5 + $0x128] sm:$0xff]
    %v120 = vld [vmem:[#allocation5 + $0x130] sm:$0xff]
    %v121 = vld [vmem:[#allocation5 + $0x138] sm:$0xff]
    %v122 = vld [vmem:[#allocation5 + $0x140] sm:$0xff]
    %v123 = vld [vmem:[#allocation5 + $0x148] sm:$0xff]
    %v124 = vld [vmem:[#allocation5 + $0x150] sm:$0xff]
    %v125 = vld [vmem:[#allocation5 + $0x158] sm:$0xff]
    %v126 = vld [vmem:[#allocation5 + $0x160] sm:$0xff]
    %v127 = vld [vmem:[#allocation5 + $0x168] sm:$0xff]
    %v128 = vld [vmem:[#allocation5 + $0x170] sm:$0xff]
    %v129 = vld [vmem:[#allocation5 + $0x178] sm:$0xff]
    %v130 = vld [vmem:[%s2] sm:$0xf]
    %v132 = vlaneseq
    %v133 = vshrl.u32 %v132, 7
    %v134 = vsub.s32 0, %v133
    %v135 = vrot.slane %v130, %v134
    %v136 = vlaneseq
    %v137 = vshrl.u32 %v136, 7
    %v138 = vsub.s32 1, %v137
    %v139 = vrot.slane %v130, %v138
    %v140 = vlaneseq
    %v141 = vshrl.u32 %v140, 7
    %v142 = vsub.s32 2, %v141
    %v143 = vrot.slane %v130, %v142
    %v144 = vlaneseq
    %v145 = vshrl.u32 %v144, 7
    %v146 = vsub.s32 3, %v145
    %v147 = vrot.slane %v130, %v146
    %v153 = vunpack.c.l.b16 %v81
    %v154 = vunpack.c.h.b16 %v81
    %v155 = vpack.c.b16 %v153, %v153
    %v156 = vpack.c.b16 %v154, %v154
    %v206 = vunpack.c.l.b16 %v82
    %v207 = vunpack.c.h.b16 %v82
    %v208 = vunpack.c.l.b16 %v83
    %v209 = vunpack.c.h.b16 %v83
    %v210 = vunpack.c.l.b16 %v84
    %v211 = vunpack.c.h.b16 %v84
    %v212 = vunpack.c.l.b16 %v85
    %v213 = vunpack.c.h.b16 %v85
    %v214 = vunpack.c.l.b16 %v86
    %v215 = vunpack.c.h.b16 %v86
    %v216 = vunpack.c.l.b16 %v87
    %v217 = vunpack.c.h.b16 %v87
    %v218 = vunpack.c.l.b16 %v88
    %v219 = vunpack.c.h.b16 %v88
    %v220 = vunpack.c.l.b16 %v89
    %v221 = vunpack.c.h.b16 %v89
    %v222 = vunpack.c.l.b16 %v90
    %v223 = vunpack.c.h.b16 %v90
    %v224 = vunpack.c.l.b16 %v91
    %v225 = vunpack.c.h.b16 %v91
    %v226 = vunpack.c.l.b16 %v92
    %v227 = vunpack.c.h.b16 %v92
    %v228 = vunpack.c.l.b16 %v93
    %v229 = vunpack.c.h.b16 %v93
    %v230 = vunpack.c.l.b16 %v94
    %v231 = vunpack.c.h.b16 %v94
    %v232 = vunpack.c.l.b16 %v95
    %v233 = vunpack.c.h.b16 %v95
    %v234 = vunpack.c.l.b16 %v96
    %v235 = vunpack.c.h.b16 %v96
    %v236 = vunpack.c.l.b16 %v97
    %v237 = vunpack.c.h.b16 %v97
    %v238 = vunpack.c.l.b16 %v98
    %v239 = vunpack.c.h.b16 %v98
    %v240 = vunpack.c.l.b16 %v99
    %v241 = vunpack.c.h.b16 %v99
    %v242 = vunpack.c.l.b16 %v100
    %v243 = vunpack.c.h.b16 %v100
    %v244 = vunpack.c.l.b16 %v101
    %v245 = vunpack.c.h.b16 %v101
    %v246 = vunpack.c.l.b16 %v102
    %v247 = vunpack.c.h.b16 %v102
    %v248 = vunpack.c.l.b16 %v103
    %v249 = vunpack.c.h.b16 %v103
    %v250 = vunpack.c.l.b16 %v104
    %v251 = vunpack.c.h.b16 %v104
    %v252 = vunpack.c.l.b16 %v105
    %v253 = vunpack.c.h.b16 %v105
    %v254 = vunpack.c.l.b16 %v106
    %v255 = vunpack.c.h.b16 %v106
    %v256 = vunpack.c.l.b16 %v107
    %v257 = vunpack.c.h.b16 %v107
    %v258 = vunpack.c.l.b16 %v108
    %v259 = vunpack.c.h.b16 %v108
    %v260 = vunpack.c.l.b16 %v109
    %v261 = vunpack.c.h.b16 %v109
    %v262 = vunpack.c.l.b16 %v110
    %v263 = vunpack.c.h.b16 %v110
    %v264 = vunpack.c.l.b16 %v111
    %v265 = vunpack.c.h.b16 %v111
    %v266 = vunpack.c.l.b16 %v112
    %v267 = vunpack.c.h.b16 %v112
    %v268 = vunpack.c.l.b16 %v113
    %v269 = vunpack.c.h.b16 %v113
    %v270 = vunpack.c.l.b16 %v114
    %v271 = vunpack.c.h.b16 %v114
    %v272 = vunpack.c.l.b16 %v115
    %v273 = vunpack.c.h.b16 %v115
    %v274 = vunpack.c.l.b16 %v116
    %v275 = vunpack.c.h.b16 %v116
    %v276 = vunpack.c.l.b16 %v117
    %v277 = vunpack.c.h.b16 %v117
    %v278 = vunpack.c.l.b16 %v118
    %v279 = vunpack.c.h.b16 %v118
    %v280 = vunpack.c.l.b16 %v119
    %v281 = vunpack.c.h.b16 %v119
    %v282 = vunpack.c.l.b16 %v120
    %v283 = vunpack.c.h.b16 %v120
    %v284 = vunpack.c.l.b16 %v121
    %v285 = vunpack.c.h.b16 %v121
    %v286 = vunpack.c.l.b16 %v122
    %v287 = vunpack.c.h.b16 %v122
    %v288 = vunpack.c.l.b16 %v123
    %v289 = vunpack.c.h.b16 %v123
    %v290 = vunpack.c.l.b16 %v124
    %v291 = vunpack.c.h.b16 %v124
    %v292 = vunpack.c.l.b16 %v125
    %v293 = vunpack.c.h.b16 %v125
    %v294 = vunpack.c.l.b16 %v126
    %v295 = vunpack.c.h.b16 %v126
    %v296 = vunpack.c.l.b16 %v127
    %v297 = vunpack.c.h.b16 %v127
    %v298 = vunpack.c.l.b16 %v128
    %v299 = vunpack.c.h.b16 %v128
    %v300 = vunpack.c.l.b16 %v129
    %v301 = vunpack.c.h.b16 %v129
    %v302 = vpack.c.b16 %v210, %v206
    %v303 = vpack.c.b16 %v211, %v207
    %v304 = vpack.c.b16 %v212, %v208
    %v305 = vpack.c.b16 %v213, %v209
    %v306 = vpack.c.b16 %v218, %v214
    %v307 = vpack.c.b16 %v219, %v215
    %v308 = vpack.c.b16 %v220, %v216
    %v309 = vpack.c.b16 %v221, %v217
    %v310 = vpack.c.b16 %v226, %v222
    %v311 = vpack.c.b16 %v227, %v223
    %v312 = vpack.c.b16 %v228, %v224
    %v313 = vpack.c.b16 %v229, %v225
    %v314 = vpack.c.b16 %v234, %v230
    %v315 = vpack.c.b16 %v235, %v231
    %v316 = vpack.c.b16 %v236, %v232
    %v317 = vpack.c.b16 %v237, %v233
    %v318 = vpack.c.b16 %v242, %v238
    %v319 = vpack.c.b16 %v243, %v239
    %v320 = vpack.c.b16 %v244, %v240
    %v321 = vpack.c.b16 %v245, %v241
    %v322 = vpack.c.b16 %v250, %v246
    %v323 = vpack.c.b16 %v251, %v247
    %v324 = vpack.c.b16 %v252, %v248
    %v325 = vpack.c.b16 %v253, %v249
    %v326 = vpack.c.b16 %v258, %v254
    %v327 = vpack.c.b16 %v259, %v255
    %v328 = vpack.c.b16 %v260, %v256
    %v329 = vpack.c.b16 %v261, %v257
    %v330 = vpack.c.b16 %v266, %v262
    %v331 = vpack.c.b16 %v267, %v263
    %v332 = vpack.c.b16 %v268, %v264
    %v333 = vpack.c.b16 %v269, %v265
    %v334 = vpack.c.b16 %v274, %v270
    %v335 = vpack.c.b16 %v275, %v271
    %v336 = vpack.c.b16 %v276, %v272
    %v337 = vpack.c.b16 %v277, %v273
    %v338 = vpack.c.b16 %v282, %v278
    %v339 = vpack.c.b16 %v283, %v279
    %v340 = vpack.c.b16 %v284, %v280
    %v341 = vpack.c.b16 %v285, %v281
    %v342 = vpack.c.b16 %v290, %v286
    %v343 = vpack.c.b16 %v291, %v287
    %v344 = vpack.c.b16 %v292, %v288
    %v345 = vpack.c.b16 %v293, %v289
    %v346 = vpack.c.b16 %v298, %v294
    %v347 = vpack.c.b16 %v299, %v295
    %v348 = vpack.c.b16 %v300, %v296
    %v349 = vpack.c.b16 %v301, %v297
    %vm398 = vcmask 523264
    %v400 = vsel %vm398, %v156, 0
    %402 = vmatprep.subr.bf16.mxu0 %v303
    %403 = vmatpush1.bf16.msra.mxu0 %v302
    %404 = vmatprep.subr.bf16.mxu0 %v307
    %405 = vmatpush1.bf16.msra.mxu0 %v306
    %406 = vmatprep.subr.bf16.mxu0 %v311
    %407 = vmatpush1.bf16.msra.mxu0 %v310
    %408 = vmatprep.subr.bf16.mxu0 %v315
    %409 = vmatpush1.bf16.msra.mxu0 %v314
    %410 = vmatprep.subr.bf16.mxu0 %v319
    %411 = vmatpush1.bf16.msra.mxu0 %v318
    %412 = vmatprep.subr.bf16.mxu0 %v323
    %413 = vmatpush1.bf16.msra.mxu0 %v322
    %414 = vmatprep.subr.bf16.mxu0 %v327
    %415 = vmatpush1.bf16.msra.mxu0 %v326
    %416 = vmatprep.subr.bf16.mxu0 %v331
    %417 = vmatpush1.bf16.msra.mxu0 %v330
    %418 = vmatprep.subr.bf16.mxu0 %v335
    %419 = vmatpush1.bf16.msra.mxu0 %v334
    %420 = vmatprep.subr.bf16.mxu0 %v339
    %421 = vmatpush1.bf16.msra.mxu0 %v338
    %422 = vmatprep.subr.bf16.mxu0 %v343
    %423 = vmatpush1.bf16.msra.mxu0 %v342
    %424 = vmatprep.subr.bf16.mxu0 %v347
    %425 = vmatpush1.bf16.msra.mxu0 %v346
    %426 = vmatprep.subr.bf16.mxu0 0
    %427 = vmatpush1.bf16.msra.mxu0 0
    %428 = vmatprep.subr.bf16.mxu0 0
    %429 = vmatpush1.bf16.msra.mxu0 0
    %430 = vmatprep.subr.bf16.mxu0 0
    %431 = vmatpush1.bf16.msra.mxu0 0
    %432 = vmatprep.subr.bf16.mxu0 0
    %433 = vmatpush1.bf16.msra.mxu0 0
    %434 = vmatprep.mubr.bf16.mxu0 %v400
    %435 = vmatmul.mubr.bf16.gmra.mrb[0].mxu0 %v155
    %v436 = vpop.f32.mrb[0].mxu0
    %v437 = vadd.f32 %v135, %v436
    %v438 = vpop.f32.mrb[0].mxu0
    %v439 = vadd.f32 %v139, %v438
    %v440 = vpop.f32.mrb[0].mxu0
    %v441 = vpop.f32.mrb[0].mxu0
    %442 = vdwg.mxu0
    %443 = vmatprep.subr.bf16.mxu0 %v305
    %444 = vmatpush1.bf16.msra.mxu0 %v304
    %445 = vmatprep.subr.bf16.mxu0 %v309
    %446 = vmatpush1.bf16.msra.mxu0 %v308
    %447 = vmatprep.subr.bf16.mxu0 %v313
    %448 = vmatpush1.bf16.msra.mxu0 %v312
    %449 = vmatprep.subr.bf16.mxu0 %v317
    %450 = vmatpush1.bf16.msra.mxu0 %v316
    %451 = vmatprep.subr.bf16.mxu0 %v321
    %452 = vmatpush1.bf16.msra.mxu0 %v320
    %453 = vmatprep.subr.bf16.mxu0 %v325
    %454 = vmatpush1.bf16.msra.mxu0 %v324
    %455 = vmatprep.subr.bf16.mxu0 %v329
    %456 = vmatpush1.bf16.msra.mxu0 %v328
    %457 = vmatprep.subr.bf16.mxu0 %v333
    %458 = vmatpush1.bf16.msra.mxu0 %v332
    %459 = vmatprep.subr.bf16.mxu0 %v337
    %460 = vmatpush1.bf16.msra.mxu0 %v336
    %461 = vmatprep.subr.bf16.mxu0 %v341
    %462 = vmatpush1.bf16.msra.mxu0 %v340
    %463 = vmatprep.subr.bf16.mxu0 %v345
    %464 = vmatpush1.bf16.msra.mxu0 %v344
    %465 = vmatprep.subr.bf16.mxu0 %v349
    %466 = vmatpush1.bf16.msra.mxu0 %v348
    %467 = vmatprep.subr.bf16.mxu0 0
    %468 = vmatpush1.bf16.msra.mxu0 0
    %469 = vmatprep.subr.bf16.mxu0 0
    %470 = vmatpush1.bf16.msra.mxu0 0
    %471 = vmatprep.subr.bf16.mxu0 0
    %472 = vmatpush1.bf16.msra.mxu0 0
    %473 = vmatprep.subr.bf16.mxu0 0
    %474 = vmatpush1.bf16.msra.mxu0 0
    %475 = vmatprep.mubr.bf16.mxu0 %v400
    %476 = vmatmul.mubr.bf16.gmra.mrb[0].mxu0 %v155
    %v477 = vpop.f32.mrb[0].mxu0
    %v478 = vadd.f32 %v143, %v477
    %v479 = vpop.f32.mrb[0].mxu0
    %v480 = vadd.f32 %v147, %v479
    %v481 = vpop.f32.mrb[0].mxu0
    %v482 = vpop.f32.mrb[0].mxu0
    %483 = vdwg.mxu0
    %v484 = vmax.f32 %v437, 0.0
    %v485 = vmax.f32 %v439, 0.0
    %v486 = vmax.f32 %v478, 0.0
    %v487 = vmax.f32 %v480, 0.0
    %v488 = vpack.c.bf16 %v484, %v484
    %v489 = vpack.c.bf16 %v485, %v485
    %v490 = vpack.c.bf16 %v486, %v486
    %v491 = vpack.c.bf16 %v487, %v487
    %v492 = vld [vmem:[#allocation7] sm:$0xff]
    %v493 = vld [vmem:[#allocation7 + $0x8] sm:$0xff]
    %v494 = vld [vmem:[#allocation7 + $0x10] sm:$0xff]
    %v495 = vld [vmem:[#allocation7 + $0x18] sm:$0xff]
    %v496 = vld [vmem:[#allocation7 + $0x20] sm:$0xff]
    %v497 = vld [vmem:[#allocation7 + $0x28] sm:$0xff]
    %v498 = vld [vmem:[#allocation7 + $0x30] sm:$0xff]
    %v499 = vld [vmem:[#allocation7 + $0x38] sm:$0xff]
    %v500 = vld [vmem:[#allocation7 + $0x40] sm:$0xff]
    %v501 = vld [vmem:[#allocation7 + $0x48] sm:$0xff]
    %v502 = vld [vmem:[#allocation7 + $0x50] sm:$0xff]
    %v503 = vld [vmem:[#allocation7 + $0x58] sm:$0xff]
    %v504 = vld [vmem:[#allocation7 + $0x60] sm:$0xff]
    %v505 = vld [vmem:[#allocation7 + $0x68] sm:$0xff]
    %v506 = vld [vmem:[#allocation7 + $0x70] sm:$0xff]
    %v507 = vld [vmem:[#allocation7 + $0x78] sm:$0xff]
    %v508 = vld [vmem:[#allocation7 + $0x80] sm:$0xff]
    %v509 = vld [vmem:[#allocation7 + $0x88] sm:$0xff]
    %v510 = vld [vmem:[#allocation7 + $0x90] sm:$0xff]
    %v511 = vld [vmem:[#allocation7 + $0x98] sm:$0xff]
    %v512 = vld [vmem:[#allocation7 + $0xa0] sm:$0xff]
    %v513 = vld [vmem:[#allocation7 + $0xa8] sm:$0xff]
    %v514 = vld [vmem:[#allocation7 + $0xb0] sm:$0xff]
    %v515 = vld [vmem:[#allocation7 + $0xb8] sm:$0xff]
    %v516 = vld [vmem:[#allocation7 + $0xc0] sm:$0xff]
    %v517 = vld [vmem:[#allocation7 + $0xc8] sm:$0xff]
    %v518 = vld [vmem:[#allocation7 + $0xd0] sm:$0xff]
    %v519 = vld [vmem:[#allocation7 + $0xd8] sm:$0xff]
    %v520 = vld [vmem:[#allocation7 + $0xe0] sm:$0xff]
    %v521 = vld [vmem:[#allocation7 + $0xe8] sm:$0xff]
    %v522 = vld [vmem:[#allocation7 + $0xf0] sm:$0xff]
    %v523 = vld [vmem:[#allocation7 + $0xf8] sm:$0xff]
    %v524 = vld [vmem:[#allocation7 + $0x100] sm:$0xff]
    %v525 = vld [vmem:[#allocation7 + $0x108] sm:$0xff]
    %v526 = vld [vmem:[#allocation7 + $0x110] sm:$0xff]
    %v527 = vld [vmem:[#allocation7 + $0x118] sm:$0xff]
    %v528 = vld [vmem:[#allocation7 + $0x120] sm:$0xff]
    %v529 = vld [vmem:[#allocation7 + $0x128] sm:$0xff]
    %v530 = vld [vmem:[#allocation7 + $0x130] sm:$0xff]
    %v531 = vld [vmem:[#allocation7 + $0x138] sm:$0xff]
    %v532 = vld [vmem:[#allocation7 + $0x140] sm:$0xff]
    %v533 = vld [vmem:[#allocation7 + $0x148] sm:$0xff]
    %v534 = vld [vmem:[#allocation7 + $0x150] sm:$0xff]
    %v535 = vld [vmem:[#allocation7 + $0x158] sm:$0xff]
    %v536 = vld [vmem:[#allocation7 + $0x160] sm:$0xff]
    %v537 = vld [vmem:[#allocation7 + $0x168] sm:$0xff]
    %v538 = vld [vmem:[#allocation7 + $0x170] sm:$0xff]
    %v539 = vld [vmem:[#allocation7 + $0x178] sm:$0xff]
    %v540 = vld [vmem:[#allocation7 + $0x180] sm:$0xff]
    %v541 = vld [vmem:[#allocation7 + $0x188] sm:$0xff]
    %v542 = vld [vmem:[#allocation7 + $0x190] sm:$0xff]
    %v543 = vld [vmem:[#allocation7 + $0x198] sm:$0xff]
    %v544 = vld [vmem:[#allocation7 + $0x1a0] sm:$0xff]
    %v545 = vld [vmem:[#allocation7 + $0x1a8] sm:$0xff]
    %v546 = vld [vmem:[#allocation7 + $0x1b0] sm:$0xff]
    %v547 = vld [vmem:[#allocation7 + $0x1b8] sm:$0xff]
    %v548 = vld [vmem:[#allocation7 + $0x1c0] sm:$0xff]
    %v549 = vld [vmem:[#allocation7 + $0x1c8] sm:$0xff]
    %v550 = vld [vmem:[#allocation7 + $0x1d0] sm:$0xff]
    %v551 = vld [vmem:[#allocation7 + $0x1d8] sm:$0xff]
    %v552 = vld [vmem:[#allocation7 + $0x1e0] sm:$0xff]
    %v553 = vld [vmem:[#allocation7 + $0x1e8] sm:$0xff]
    %v554 = vld [vmem:[#allocation7 + $0x1f0] sm:$0xff]
    %v555 = vld [vmem:[#allocation7 + $0x1f8] sm:$0xff]
    %v556 = vld [vmem:[#allocation7 + $0x200] sm:$0xff]
    %v557 = vld [vmem:[#allocation7 + $0x208] sm:$0xff]
    %v558 = vld [vmem:[#allocation7 + $0x210] sm:$0xff]
    %v559 = vld [vmem:[#allocation7 + $0x218] sm:$0xff]
    %v560 = vld [vmem:[#allocation7 + $0x220] sm:$0xff]
    %v561 = vld [vmem:[#allocation7 + $0x228] sm:$0xff]
    %v562 = vld [vmem:[#allocation7 + $0x230] sm:$0xff]
    %v563 = vld [vmem:[#allocation7 + $0x238] sm:$0xff]
    %v564 = vld [vmem:[#allocation7 + $0x240] sm:$0xff]
    %v565 = vld [vmem:[#allocation7 + $0x248] sm:$0xff]
    %v566 = vld [vmem:[#allocation7 + $0x250] sm:$0xff]
    %v567 = vld [vmem:[#allocation7 + $0x258] sm:$0xff]
    %v568 = vld [vmem:[#allocation7 + $0x260] sm:$0xff]
    %v569 = vld [vmem:[#allocation7 + $0x268] sm:$0xff]
    %v570 = vld [vmem:[#allocation7 + $0x270] sm:$0xff]
    %v571 = vld [vmem:[#allocation7 + $0x278] sm:$0xff]
    %v572 = vld [vmem:[#allocation7 + $0x280] sm:$0xff]
    %v573 = vld [vmem:[#allocation7 + $0x288] sm:$0xff]
    %v574 = vld [vmem:[#allocation7 + $0x290] sm:$0xff]
    %v575 = vld [vmem:[#allocation7 + $0x298] sm:$0xff]
    %v576 = vld [vmem:[#allocation7 + $0x2a0] sm:$0xff]
    %v577 = vld [vmem:[#allocation7 + $0x2a8] sm:$0xff]
    %v578 = vld [vmem:[#allocation7 + $0x2b0] sm:$0xff]
    %v579 = vld [vmem:[#allocation7 + $0x2b8] sm:$0xff]
    %v580 = vld [vmem:[#allocation7 + $0x2c0] sm:$0xff]
    %v581 = vld [vmem:[#allocation7 + $0x2c8] sm:$0xff]
    %v582 = vld [vmem:[#allocation7 + $0x2d0] sm:$0xff]
    %v583 = vld [vmem:[#allocation7 + $0x2d8] sm:$0xff]
    %v584 = vld [vmem:[#allocation7 + $0x2e0] sm:$0xff]
    %v585 = vld [vmem:[#allocation7 + $0x2e8] sm:$0xff]
    %v586 = vld [vmem:[#allocation7 + $0x2f0] sm:$0xff]
    %v587 = vld [vmem:[#allocation7 + $0x2f8] sm:$0xff]
    %v588 = vld [vmem:[#allocation7 + $0x300] sm:$0xff]
    %v589 = vld [vmem:[#allocation7 + $0x308] sm:$0xff]
    %v590 = vld [vmem:[#allocation7 + $0x310] sm:$0xff]
    %v591 = vld [vmem:[#allocation7 + $0x318] sm:$0xff]
    %v592 = vld [vmem:[#allocation7 + $0x320] sm:$0xff]
    %v593 = vld [vmem:[#allocation7 + $0x328] sm:$0xff]
    %v594 = vld [vmem:[#allocation7 + $0x330] sm:$0xff]
    %v595 = vld [vmem:[#allocation7 + $0x338] sm:$0xff]
    %v596 = vld [vmem:[#allocation7 + $0x340] sm:$0xff]
    %v597 = vld [vmem:[#allocation7 + $0x348] sm:$0xff]
    %v598 = vld [vmem:[#allocation7 + $0x350] sm:$0xff]
    %v599 = vld [vmem:[#allocation7 + $0x358] sm:$0xff]
    %v600 = vld [vmem:[#allocation7 + $0x360] sm:$0xff]
    %v601 = vld [vmem:[#allocation7 + $0x368] sm:$0xff]
    %v602 = vld [vmem:[#allocation7 + $0x370] sm:$0xff]
    %v603 = vld [vmem:[#allocation7 + $0x378] sm:$0xff]
    %v604 = vld [vmem:[#allocation7 + $0x380] sm:$0xff]
    %v605 = vld [vmem:[#allocation7 + $0x388] sm:$0xff]
    %v606 = vld [vmem:[#allocation7 + $0x390] sm:$0xff]
    %v607 = vld [vmem:[#allocation7 + $0x398] sm:$0xff]
    %v608 = vld [vmem:[#allocation7 + $0x3a0] sm:$0xff]
    %v609 = vld [vmem:[#allocation7 + $0x3a8] sm:$0xff]
    %v610 = vld [vmem:[#allocation7 + $0x3b0] sm:$0xff]
    %v611 = vld [vmem:[#allocation7 + $0x3b8] sm:$0xff]
    %v612 = vld [vmem:[#allocation7 + $0x3c0] sm:$0xff]
    %v613 = vld [vmem:[#allocation7 + $0x3c8] sm:$0xff]
    %v614 = vld [vmem:[#allocation7 + $0x3d0] sm:$0xff]
    %v615 = vld [vmem:[#allocation7 + $0x3d8] sm:$0xff]
    %v616 = vld [vmem:[#allocation7 + $0x3e0] sm:$0xff]
    %v617 = vld [vmem:[#allocation7 + $0x3e8] sm:$0xff]
    %v618 = vld [vmem:[#allocation7 + $0x3f0] sm:$0xff]
    %v619 = vld [vmem:[#allocation7 + $0x3f8] sm:$0xff]
    %v620 = vld [vmem:[%s4] sm:$0xf]
    %v622 = vlaneseq
    %v623 = vshrl.u32 %v622, 7
    %v624 = vsub.s32 0, %v623
    %v625 = vrot.slane %v620, %v624
    %v626 = vlaneseq
    %v627 = vshrl.u32 %v626, 7
    %v628 = vsub.s32 1, %v627
    %v629 = vrot.slane %v620, %v628
    %v630 = vlaneseq
    %v631 = vshrl.u32 %v630, 7
    %v632 = vsub.s32 2, %v631
    %v633 = vrot.slane %v620, %v632
    %v634 = vlaneseq
    %v635 = vshrl.u32 %v634, 7
    %v636 = vsub.s32 3, %v635
    %v637 = vrot.slane %v620, %v636
    %v770 = vunpack.c.l.b16 %v492
    %v771 = vunpack.c.h.b16 %v492
    %v772 = vunpack.c.l.b16 %v493
    %v773 = vunpack.c.h.b16 %v493
    %v774 = vunpack.c.l.b16 %v494
    %v775 = vunpack.c.h.b16 %v494
    %v776 = vunpack.c.l.b16 %v495
    %v777 = vunpack.c.h.b16 %v495
    %v778 = vunpack.c.l.b16 %v496
    %v779 = vunpack.c.h.b16 %v496
    %v780 = vunpack.c.l.b16 %v497
    %v781 = vunpack.c.h.b16 %v497
    %v782 = vunpack.c.l.b16 %v498
    %v783 = vunpack.c.h.b16 %v498
    %v784 = vunpack.c.l.b16 %v499
    %v785 = vunpack.c.h.b16 %v499
    %v786 = vunpack.c.l.b16 %v500
    %v787 = vunpack.c.h.b16 %v500
    %v788 = vunpack.c.l.b16 %v501
    %v789 = vunpack.c.h.b16 %v501
    %v790 = vunpack.c.l.b16 %v502
    %v791 = vunpack.c.h.b16 %v502
    %v792 = vunpack.c.l.b16 %v503
    %v793 = vunpack.c.h.b16 %v503
    %v794 = vunpack.c.l.b16 %v504
    %v795 = vunpack.c.h.b16 %v504
    %v796 = vunpack.c.l.b16 %v505
    %v797 = vunpack.c.h.b16 %v505
    %v798 = vunpack.c.l.b16 %v506
    %v799 = vunpack.c.h.b16 %v506
    %v800 = vunpack.c.l.b16 %v507
    %v801 = vunpack.c.h.b16 %v507
    %v802 = vunpack.c.l.b16 %v508
    %v803 = vunpack.c.h.b16 %v508
    %v804 = vunpack.c.l.b16 %v509
    %v805 = vunpack.c.h.b16 %v509
    %v806 = vunpack.c.l.b16 %v510
    %v807 = vunpack.c.h.b16 %v510
    %v808 = vunpack.c.l.b16 %v511
    %v809 = vunpack.c.h.b16 %v511
    %v810 = vunpack.c.l.b16 %v512
    %v811 = vunpack.c.h.b16 %v512
    %v812 = vunpack.c.l.b16 %v513
    %v813 = vunpack.c.h.b16 %v513
    %v814 = vunpack.c.l.b16 %v514
    %v815 = vunpack.c.h.b16 %v514
    %v816 = vunpack.c.l.b16 %v515
    %v817 = vunpack.c.h.b16 %v515
    %v818 = vunpack.c.l.b16 %v516
    %v819 = vunpack.c.h.b16 %v516
    %v820 = vunpack.c.l.b16 %v517
    %v821 = vunpack.c.h.b16 %v517
    %v822 = vunpack.c.l.b16 %v518
    %v823 = vunpack.c.h.b16 %v518
    %v824 = vunpack.c.l.b16 %v519
    %v825 = vunpack.c.h.b16 %v519
    %v826 = vunpack.c.l.b16 %v520
    %v827 = vunpack.c.h.b16 %v520
    %v828 = vunpack.c.l.b16 %v521
    %v829 = vunpack.c.h.b16 %v521
    %v830 = vunpack.c.l.b16 %v522
    %v831 = vunpack.c.h.b16 %v522
    %v832 = vunpack.c.l.b16 %v523
    %v833 = vunpack.c.h.b16 %v523
    %v834 = vunpack.c.l.b16 %v524
    %v835 = vunpack.c.h.b16 %v524
    %v836 = vunpack.c.l.b16 %v525
    %v837 = vunpack.c.h.b16 %v525
    %v838 = vunpack.c.l.b16 %v526
    %v839 = vunpack.c.h.b16 %v526
    %v840 = vunpack.c.l.b16 %v527
    %v841 = vunpack.c.h.b16 %v527
    %v842 = vunpack.c.l.b16 %v528
    %v843 = vunpack.c.h.b16 %v528
    %v844 = vunpack.c.l.b16 %v529
    %v845 = vunpack.c.h.b16 %v529
    %v846 = vunpack.c.l.b16 %v530
    %v847 = vunpack.c.h.b16 %v530
    %v848 = vunpack.c.l.b16 %v531
    %v849 = vunpack.c.h.b16 %v531
    %v850 = vunpack.c.l.b16 %v532
    %v851 = vunpack.c.h.b16 %v532
    %v852 = vunpack.c.l.b16 %v533
    %v853 = vunpack.c.h.b16 %v533
    %v854 = vunpack.c.l.b16 %v534
    %v855 = vunpack.c.h.b16 %v534
    %v856 = vunpack.c.l.b16 %v535
    %v857 = vunpack.c.h.b16 %v535
    %v858 = vunpack.c.l.b16 %v536
    %v859 = vunpack.c.h.b16 %v536
    %v860 = vunpack.c.l.b16 %v537
    %v861 = vunpack.c.h.b16 %v537
    %v862 = vunpack.c.l.b16 %v538
    %v863 = vunpack.c.h.b16 %v538
    %v864 = vunpack.c.l.b16 %v539
    %v865 = vunpack.c.h.b16 %v539
    %v866 = vunpack.c.l.b16 %v540
    %v867 = vunpack.c.h.b16 %v540
    %v868 = vunpack.c.l.b16 %v541
    %v869 = vunpack.c.h.b16 %v541
    %v870 = vunpack.c.l.b16 %v542
    %v871 = vunpack.c.h.b16 %v542
    %v872 = vunpack.c.l.b16 %v543
    %v873 = vunpack.c.h.b16 %v543
    %v874 = vunpack.c.l.b16 %v544
    %v875 = vunpack.c.h.b16 %v544
    %v876 = vunpack.c.l.b16 %v545
    %v877 = vunpack.c.h.b16 %v545
    %v878 = vunpack.c.l.b16 %v546
    %v879 = vunpack.c.h.b16 %v546
    %v880 = vunpack.c.l.b16 %v547
    %v881 = vunpack.c.h.b16 %v547
    %v882 = vunpack.c.l.b16 %v548
    %v883 = vunpack.c.h.b16 %v548
    %v884 = vunpack.c.l.b16 %v549
    %v885 = vunpack.c.h.b16 %v549
    %v886 = vunpack.c.l.b16 %v550
    %v887 = vunpack.c.h.b16 %v550
    %v888 = vunpack.c.l.b16 %v551
    %v889 = vunpack.c.h.b16 %v551
    %v890 = vunpack.c.l.b16 %v552
    %v891 = vunpack.c.h.b16 %v552
    %v892 = vunpack.c.l.b16 %v553
    %v893 = vunpack.c.h.b16 %v553
    %v894 = vunpack.c.l.b16 %v554
    %v895 = vunpack.c.h.b16 %v554
    %v896 = vunpack.c.l.b16 %v555
    %v897 = vunpack.c.h.b16 %v555
    %v898 = vunpack.c.l.b16 %v556
    %v899 = vunpack.c.h.b16 %v556
    %v900 = vunpack.c.l.b16 %v557
    %v901 = vunpack.c.h.b16 %v557
    %v902 = vunpack.c.l.b16 %v558
    %v903 = vunpack.c.h.b16 %v558
    %v904 = vunpack.c.l.b16 %v559
    %v905 = vunpack.c.h.b16 %v559
    %v906 = vunpack.c.l.b16 %v560
    %v907 = vunpack.c.h.b16 %v560
    %v908 = vunpack.c.l.b16 %v561
    %v909 = vunpack.c.h.b16 %v561
    %v910 = vunpack.c.l.b16 %v562
    %v911 = vunpack.c.h.b16 %v562
    %v912 = vunpack.c.l.b16 %v563
    %v913 = vunpack.c.h.b16 %v563
    %v914 = vunpack.c.l.b16 %v564
    %v915 = vunpack.c.h.b16 %v564
    %v916 = vunpack.c.l.b16 %v565
    %v917 = vunpack.c.h.b16 %v565
    %v918 = vunpack.c.l.b16 %v566
    %v919 = vunpack.c.h.b16 %v566
    %v920 = vunpack.c.l.b16 %v567
    %v921 = vunpack.c.h.b16 %v567
    %v922 = vunpack.c.l.b16 %v568
    %v923 = vunpack.c.h.b16 %v568
    %v924 = vunpack.c.l.b16 %v569
    %v925 = vunpack.c.h.b16 %v569
    %v926 = vunpack.c.l.b16 %v570
    %v927 = vunpack.c.h.b16 %v570
    %v928 = vunpack.c.l.b16 %v571
    %v929 = vunpack.c.h.b16 %v571
    %v930 = vunpack.c.l.b16 %v572
    %v931 = vunpack.c.h.b16 %v572
    %v932 = vunpack.c.l.b16 %v573
    %v933 = vunpack.c.h.b16 %v573
    %v934 = vunpack.c.l.b16 %v574
    %v935 = vunpack.c.h.b16 %v574
    %v936 = vunpack.c.l.b16 %v575
    %v937 = vunpack.c.h.b16 %v575
    %v938 = vunpack.c.l.b16 %v576
    %v939 = vunpack.c.h.b16 %v576
    %v940 = vunpack.c.l.b16 %v577
    %v941 = vunpack.c.h.b16 %v577
    %v942 = vunpack.c.l.b16 %v578
    %v943 = vunpack.c.h.b16 %v578
    %v944 = vunpack.c.l.b16 %v579
    %v945 = vunpack.c.h.b16 %v579
    %v946 = vunpack.c.l.b16 %v580
    %v947 = vunpack.c.h.b16 %v580
    %v948 = vunpack.c.l.b16 %v581
    %v949 = vunpack.c.h.b16 %v581
    %v950 = vunpack.c.l.b16 %v582
    %v951 = vunpack.c.h.b16 %v582
    %v952 = vunpack.c.l.b16 %v583
    %v953 = vunpack.c.h.b16 %v583
    %v954 = vunpack.c.l.b16 %v584
    %v955 = vunpack.c.h.b16 %v584
    %v956 = vunpack.c.l.b16 %v585
    %v957 = vunpack.c.h.b16 %v585
    %v958 = vunpack.c.l.b16 %v586
    %v959 = vunpack.c.h.b16 %v586
    %v960 = vunpack.c.l.b16 %v587
    %v961 = vunpack.c.h.b16 %v587
    %v962 = vunpack.c.l.b16 %v588
    %v963 = vunpack.c.h.b16 %v588
    %v964 = vunpack.c.l.b16 %v589
    %v965 = vunpack.c.h.b16 %v589
    %v966 = vunpack.c.l.b16 %v590
    %v967 = vunpack.c.h.b16 %v590
    %v968 = vunpack.c.l.b16 %v591
    %v969 = vunpack.c.h.b16 %v591
    %v970 = vunpack.c.l.b16 %v592
    %v971 = vunpack.c.h.b16 %v592
    %v972 = vunpack.c.l.b16 %v593
    %v973 = vunpack.c.h.b16 %v593
    %v974 = vunpack.c.l.b16 %v594
    %v975 = vunpack.c.h.b16 %v594
    %v976 = vunpack.c.l.b16 %v595
    %v977 = vunpack.c.h.b16 %v595
    %v978 = vunpack.c.l.b16 %v596
    %v979 = vunpack.c.h.b16 %v596
    %v980 = vunpack.c.l.b16 %v597
    %v981 = vunpack.c.h.b16 %v597
    %v982 = vunpack.c.l.b16 %v598
    %v983 = vunpack.c.h.b16 %v598
    %v984 = vunpack.c.l.b16 %v599
    %v985 = vunpack.c.h.b16 %v599
    %v986 = vunpack.c.l.b16 %v600
    %v987 = vunpack.c.h.b16 %v600
    %v988 = vunpack.c.l.b16 %v601
    %v989 = vunpack.c.h.b16 %v601
    %v990 = vunpack.c.l.b16 %v602
    %v991 = vunpack.c.h.b16 %v602
    %v992 = vunpack.c.l.b16 %v603
    %v993 = vunpack.c.h.b16 %v603
    %v994 = vunpack.c.l.b16 %v604
    %v995 = vunpack.c.h.b16 %v604
    %v996 = vunpack.c.l.b16 %v605
    %v997 = vunpack.c.h.b16 %v605
    %v998 = vunpack.c.l.b16 %v606
    %v999 = vunpack.c.h.b16 %v606
    %v1000 = vunpack.c.l.b16 %v607
    %v1001 = vunpack.c.h.b16 %v607
    %v1002 = vunpack.c.l.b16 %v608
    %v1003 = vunpack.c.h.b16 %v608
    %v1004 = vunpack.c.l.b16 %v609
    %v1005 = vunpack.c.h.b16 %v609
    %v1006 = vunpack.c.l.b16 %v610
    %v1007 = vunpack.c.h.b16 %v610
    %v1008 = vunpack.c.l.b16 %v611
    %v1009 = vunpack.c.h.b16 %v611
    %v1010 = vunpack.c.l.b16 %v612
    %v1011 = vunpack.c.h.b16 %v612
    %v1012 = vunpack.c.l.b16 %v613
    %v1013 = vunpack.c.h.b16 %v613
    %v1014 = vunpack.c.l.b16 %v614
    %v1015 = vunpack.c.h.b16 %v614
    %v1016 = vunpack.c.l.b16 %v615
    %v1017 = vunpack.c.h.b16 %v615
    %v1018 = vunpack.c.l.b16 %v616
    %v1019 = vunpack.c.h.b16 %v616
    %v1020 = vunpack.c.l.b16 %v617
    %v1021 = vunpack.c.h.b16 %v617
    %v1022 = vunpack.c.l.b16 %v618
    %v1023 = vunpack.c.h.b16 %v618
    %v1024 = vunpack.c.l.b16 %v619
    %v1025 = vunpack.c.h.b16 %v619
    %v1026 = vpack.c.b16 %v774, %v770
    %v1027 = vpack.c.b16 %v775, %v771
    %v1028 = vpack.c.b16 %v776, %v772
    %v1029 = vpack.c.b16 %v777, %v773
    %v1030 = vpack.c.b16 %v782, %v778
    %v1031 = vpack.c.b16 %v783, %v779
    %v1032 = vpack.c.b16 %v784, %v780
    %v1033 = vpack.c.b16 %v785, %v781
    %v1034 = vpack.c.b16 %v790, %v786
    %v1035 = vpack.c.b16 %v791, %v787
    %v1036 = vpack.c.b16 %v792, %v788
    %v1037 = vpack.c.b16 %v793, %v789
    %v1038 = vpack.c.b16 %v798, %v794
    %v1039 = vpack.c.b16 %v799, %v795
    %v1040 = vpack.c.b16 %v800, %v796
    %v1041 = vpack.c.b16 %v801, %v797
    %v1042 = vpack.c.b16 %v806, %v802
    %v1043 = vpack.c.b16 %v807, %v803
    %v1044 = vpack.c.b16 %v808, %v804
    %v1045 = vpack.c.b16 %v809, %v805
    %v1046 = vpack.c.b16 %v814, %v810
    %v1047 = vpack.c.b16 %v815, %v811
    %v1048 = vpack.c.b16 %v816, %v812
    %v1049 = vpack.c.b16 %v817, %v813
    %v1050 = vpack.c.b16 %v822, %v818
    %v1051 = vpack.c.b16 %v823, %v819
    %v1052 = vpack.c.b16 %v824, %v820
    %v1053 = vpack.c.b16 %v825, %v821
    %v1054 = vpack.c.b16 %v830, %v826
    %v1055 = vpack.c.b16 %v831, %v827
    %v1056 = vpack.c.b16 %v832, %v828
    %v1057 = vpack.c.b16 %v833, %v829
    %v1058 = vpack.c.b16 %v838, %v834
    %v1059 = vpack.c.b16 %v839, %v835
    %v1060 = vpack.c.b16 %v840, %v836
    %v1061 = vpack.c.b16 %v841, %v837
    %v1062 = vpack.c.b16 %v846, %v842
    %v1063 = vpack.c.b16 %v847, %v843
    %v1064 = vpack.c.b16 %v848, %v844
    %v1065 = vpack.c.b16 %v849, %v845
    %v1066 = vpack.c.b16 %v854, %v850
    %v1067 = vpack.c.b16 %v855, %v851
    %v1068 = vpack.c.b16 %v856, %v852
    %v1069 = vpack.c.b16 %v857, %v853
    %v1070 = vpack.c.b16 %v862, %v858
    %v1071 = vpack.c.b16 %v863, %v859
    %v1072 = vpack.c.b16 %v864, %v860
    %v1073 = vpack.c.b16 %v865, %v861
    %v1074 = vpack.c.b16 %v870, %v866
    %v1075 = vpack.c.b16 %v871, %v867
    %v1076 = vpack.c.b16 %v872, %v868
    %v1077 = vpack.c.b16 %v873, %v869
    %v1078 = vpack.c.b16 %v878, %v874
    %v1079 = vpack.c.b16 %v879, %v875
    %v1080 = vpack.c.b16 %v880, %v876
    %v1081 = vpack.c.b16 %v881, %v877
    %v1082 = vpack.c.b16 %v886, %v882
    %v1083 = vpack.c.b16 %v887, %v883
    %v1084 = vpack.c.b16 %v888, %v884
    %v1085 = vpack.c.b16 %v889, %v885
    %v1086 = vpack.c.b16 %v894, %v890
    %v1087 = vpack.c.b16 %v895, %v891
    %v1088 = vpack.c.b16 %v896, %v892
    %v1089 = vpack.c.b16 %v897, %v893
    %v1090 = vpack.c.b16 %v902, %v898
    %v1091 = vpack.c.b16 %v903, %v899
    %v1092 = vpack.c.b16 %v904, %v900
    %v1093 = vpack.c.b16 %v905, %v901
    %v1094 = vpack.c.b16 %v910, %v906
    %v1095 = vpack.c.b16 %v911, %v907
    %v1096 = vpack.c.b16 %v912, %v908
    %v1097 = vpack.c.b16 %v913, %v909
    %v1098 = vpack.c.b16 %v918, %v914
    %v1099 = vpack.c.b16 %v919, %v915
    %v1100 = vpack.c.b16 %v920, %v916
    %v1101 = vpack.c.b16 %v921, %v917
    %v1102 = vpack.c.b16 %v926, %v922
    %v1103 = vpack.c.b16 %v927, %v923
    %v1104 = vpack.c.b16 %v928, %v924
    %v1105 = vpack.c.b16 %v929, %v925
    %v1106 = vpack.c.b16 %v934, %v930
    %v1107 = vpack.c.b16 %v935, %v931
    %v1108 = vpack.c.b16 %v936, %v932
    %v1109 = vpack.c.b16 %v937, %v933
    %v1110 = vpack.c.b16 %v942, %v938
    %v1111 = vpack.c.b16 %v943, %v939
    %v1112 = vpack.c.b16 %v944, %v940
    %v1113 = vpack.c.b16 %v945, %v941
    %v1114 = vpack.c.b16 %v950, %v946
    %v1115 = vpack.c.b16 %v951, %v947
    %v1116 = vpack.c.b16 %v952, %v948
    %v1117 = vpack.c.b16 %v953, %v949
    %v1118 = vpack.c.b16 %v958, %v954
    %v1119 = vpack.c.b16 %v959, %v955
    %v1120 = vpack.c.b16 %v960, %v956
    %v1121 = vpack.c.b16 %v961, %v957
    %v1122 = vpack.c.b16 %v966, %v962
    %v1123 = vpack.c.b16 %v967, %v963
    %v1124 = vpack.c.b16 %v968, %v964
    %v1125 = vpack.c.b16 %v969, %v965
    %v1126 = vpack.c.b16 %v974, %v970
    %v1127 = vpack.c.b16 %v975, %v971
    %v1128 = vpack.c.b16 %v976, %v972
    %v1129 = vpack.c.b16 %v977, %v973
    %v1130 = vpack.c.b16 %v982, %v978
    %v1131 = vpack.c.b16 %v983, %v979
    %v1132 = vpack.c.b16 %v984, %v980
    %v1133 = vpack.c.b16 %v985, %v981
    %v1134 = vpack.c.b16 %v990, %v986
    %v1135 = vpack.c.b16 %v991, %v987
    %v1136 = vpack.c.b16 %v992, %v988
    %v1137 = vpack.c.b16 %v993, %v989
    %v1138 = vpack.c.b16 %v998, %v994
    %v1139 = vpack.c.b16 %v999, %v995
    %v1140 = vpack.c.b16 %v1000, %v996
    %v1141 = vpack.c.b16 %v1001, %v997
    %v1142 = vpack.c.b16 %v1006, %v1002
    %v1143 = vpack.c.b16 %v1007, %v1003
    %v1144 = vpack.c.b16 %v1008, %v1004
    %v1145 = vpack.c.b16 %v1009, %v1005
    %v1146 = vpack.c.b16 %v1014, %v1010
    %v1147 = vpack.c.b16 %v1015, %v1011
    %v1148 = vpack.c.b16 %v1016, %v1012
    %v1149 = vpack.c.b16 %v1017, %v1013
    %v1150 = vpack.c.b16 %v1022, %v1018
    %v1151 = vpack.c.b16 %v1023, %v1019
    %v1152 = vpack.c.b16 %v1024, %v1020
    %v1153 = vpack.c.b16 %v1025, %v1021
    %1282 = vmatprep.subr.bf16.mxu0 %v1027
    %1283 = vmatpush1.bf16.msra.mxu0 %v1026
    %1284 = vmatprep.subr.bf16.mxu0 %v1031
    %1285 = vmatpush1.bf16.msra.mxu0 %v1030
    %1286 = vmatprep.subr.bf16.mxu0 %v1035
    %1287 = vmatpush1.bf16.msra.mxu0 %v1034
    %1288 = vmatprep.subr.bf16.mxu0 %v1039
    %1289 = vmatpush1.bf16.msra.mxu0 %v1038
    %1290 = vmatprep.subr.bf16.mxu0 %v1043
    %1291 = vmatpush1.bf16.msra.mxu0 %v1042
    %1292 = vmatprep.subr.bf16.mxu0 %v1047
    %1293 = vmatpush1.bf16.msra.mxu0 %v1046
    %1294 = vmatprep.subr.bf16.mxu0 %v1051
    %1295 = vmatpush1.bf16.msra.mxu0 %v1050
    %1296 = vmatprep.subr.bf16.mxu0 %v1055
    %1297 = vmatpush1.bf16.msra.mxu0 %v1054
    %1298 = vmatprep.subr.bf16.mxu0 %v1059
    %1299 = vmatpush1.bf16.msra.mxu0 %v1058
    %1300 = vmatprep.subr.bf16.mxu0 %v1063
    %1301 = vmatpush1.bf16.msra.mxu0 %v1062
    %1302 = vmatprep.subr.bf16.mxu0 %v1067
    %1303 = vmatpush1.bf16.msra.mxu0 %v1066
    %1304 = vmatprep.subr.bf16.mxu0 %v1071
    %1305 = vmatpush1.bf16.msra.mxu0 %v1070
    %1306 = vmatprep.subr.bf16.mxu0 %v1075
    %1307 = vmatpush1.bf16.msra.mxu0 %v1074
    %1308 = vmatprep.subr.bf16.mxu0 %v1079
    %1309 = vmatpush1.bf16.msra.mxu0 %v1078
    %1310 = vmatprep.subr.bf16.mxu0 %v1083
    %1311 = vmatpush1.bf16.msra.mxu0 %v1082
    %1312 = vmatprep.subr.bf16.mxu0 %v1087
    %1313 = vmatpush1.bf16.msra.mxu0 %v1086
    %1314 = vmatprep.mubr.bf16.mxu0 %v489
    %1315 = vmatmul.mubr.bf16.gmra.mrb[0].mxu0 %v488
    %v1316 = vpop.f32.mrb[0].mxu0
    %v1317 = vadd.f32 %v625, %v1316
    %v1318 = vpop.f32.mrb[0].mxu0
    %v1319 = vadd.f32 %v629, %v1318
    %v1320 = vpop.f32.mrb[0].mxu0
    %v1321 = vpop.f32.mrb[0].mxu0
    %1322 = vdwg.mxu0
    %1323 = vmatprep.subr.bf16.mxu0 %v1091
    %1324 = vmatpush1.bf16.msra.mxu0 %v1090
    %1325 = vmatprep.subr.bf16.mxu0 %v1095
    %1326 = vmatpush1.bf16.msra.mxu0 %v1094
    %1327 = vmatprep.subr.bf16.mxu0 %v1099
    %1328 = vmatpush1.bf16.msra.mxu0 %v1098
    %1329 = vmatprep.subr.bf16.mxu0 %v1103
    %1330 = vmatpush1.bf16.msra.mxu0 %v1102
    %1331 = vmatprep.subr.bf16.mxu0 %v1107
    %1332 = vmatpush1.bf16.msra.mxu0 %v1106
    %1333 = vmatprep.subr.bf16.mxu0 %v1111
    %1334 = vmatpush1.bf16.msra.mxu0 %v1110
    %1335 = vmatprep.subr.bf16.mxu0 %v1115
    %1336 = vmatpush1.bf16.msra.mxu0 %v1114
    %1337 = vmatprep.subr.bf16.mxu0 %v1119
    %1338 = vmatpush1.bf16.msra.mxu0 %v1118
    %1339 = vmatprep.subr.bf16.mxu0 %v1123
    %1340 = vmatpush1.bf16.msra.mxu0 %v1122
    %1341 = vmatprep.subr.bf16.mxu0 %v1127
    %1342 = vmatpush1.bf16.msra.mxu0 %v1126
    %1343 = vmatprep.subr.bf16.mxu0 %v1131
    %1344 = vmatpush1.bf16.msra.mxu0 %v1130
    %1345 = vmatprep.subr.bf16.mxu0 %v1135
    %1346 = vmatpush1.bf16.msra.mxu0 %v1134
    %1347 = vmatprep.subr.bf16.mxu0 %v1139
    %1348 = vmatpush1.bf16.msra.mxu0 %v1138
    %1349 = vmatprep.subr.bf16.mxu0 %v1143
    %1350 = vmatpush1.bf16.msra.mxu0 %v1142
    %1351 = vmatprep.subr.bf16.mxu0 %v1147
    %1352 = vmatpush1.bf16.msra.mxu0 %v1146
    %1353 = vmatprep.subr.bf16.mxu0 %v1151
    %1354 = vmatpush1.bf16.msra.mxu0 %v1150
    %1355 = vmatprep.mubr.bf16.mxu0 %v491
    %1356 = vmatmul.mubr.bf16.gmra.mrb[0].mxu0 %v490
    %v1357 = vpop.f32.mrb[0].mxu0
    %v1358 = vadd.f32 %v1317, %v1357
    %v1359 = vpop.f32.mrb[0].mxu0
    %v1360 = vadd.f32 %v1319, %v1359
    %v1361 = vpop.f32.mrb[0].mxu0
    %v1362 = vpop.f32.mrb[0].mxu0
    %1363 = vdwg.mxu0
    %1364 = vmatprep.subr.bf16.mxu0 %v1029
    %1365 = vmatpush1.bf16.msra.mxu0 %v1028
    %1366 = vmatprep.subr.bf16.mxu0 %v1033
    %1367 = vmatpush1.bf16.msra.mxu0 %v1032
    %1368 = vmatprep.subr.bf16.mxu0 %v1037
    %1369 = vmatpush1.bf16.msra.mxu0 %v1036
    %1370 = vmatprep.subr.bf16.mxu0 %v1041
    %1371 = vmatpush1.bf16.msra.mxu0 %v1040
    %1372 = vmatprep.subr.bf16.mxu0 %v1045
    %1373 = vmatpush1.bf16.msra.mxu0 %v1044
    %1374 = vmatprep.subr.bf16.mxu0 %v1049
    %1375 = vmatpush1.bf16.msra.mxu0 %v1048
    %1376 = vmatprep.subr.bf16.mxu0 %v1053
    %1377 = vmatpush1.bf16.msra.mxu0 %v1052
    %1378 = vmatprep.subr.bf16.mxu0 %v1057
    %1379 = vmatpush1.bf16.msra.mxu0 %v1056
    %1380 = vmatprep.subr.bf16.mxu0 %v1061
    %1381 = vmatpush1.bf16.msra.mxu0 %v1060
    %1382 = vmatprep.subr.bf16.mxu0 %v1065
    %1383 = vmatpush1.bf16.msra.mxu0 %v1064
    %1384 = vmatprep.subr.bf16.mxu0 %v1069
    %1385 = vmatpush1.bf16.msra.mxu0 %v1068
    %1386 = vmatprep.subr.bf16.mxu0 %v1073
    %1387 = vmatpush1.bf16.msra.mxu0 %v1072
    %1388 = vmatprep.subr.bf16.mxu0 %v1077
    %1389 = vmatpush1.bf16.msra.mxu0 %v1076
    %1390 = vmatprep.subr.bf16.mxu0 %v1081
    %1391 = vmatpush1.bf16.msra.mxu0 %v1080
    %1392 = vmatprep.subr.bf16.mxu0 %v1085
    %1393 = vmatpush1.bf16.msra.mxu0 %v1084
    %1394 = vmatprep.subr.bf16.mxu0 %v1089
    %1395 = vmatpush1.bf16.msra.mxu0 %v1088
    %1396 = vmatprep.mubr.bf16.mxu0 %v489
    %1397 = vmatmul.mubr.bf16.gmra.mrb[0].mxu0 %v488
    %v1398 = vpop.f32.mrb[0].mxu0
    %v1399 = vadd.f32 %v633, %v1398
    %v1400 = vpop.f32.mrb[0].mxu0
    %v1401 = vadd.f32 %v637, %v1400
    %v1402 = vpop.f32.mrb[0].mxu0
    %v1403 = vpop.f32.mrb[0].mxu0
    %1404 = vdwg.mxu0
    %1405 = vmatprep.subr.bf16.mxu0 %v1093
    %1406 = vmatpush1.bf16.msra.mxu0 %v1092
    %1407 = vmatprep.subr.bf16.mxu0 %v1097
    %1408 = vmatpush1.bf16.msra.mxu0 %v1096
    %1409 = vmatprep.subr.bf16.mxu0 %v1101
    %1410 = vmatpush1.bf16.msra.mxu0 %v1100
    %1411 = vmatprep.subr.bf16.mxu0 %v1105
    %1412 = vmatpush1.bf16.msra.mxu0 %v1104
    %1413 = vmatprep.subr.bf16.mxu0 %v1109
    %1414 = vmatpush1.bf16.msra.mxu0 %v1108
    %1415 = vmatprep.subr.bf16.mxu0 %v1113
    %1416 = vmatpush1.bf16.msra.mxu0 %v1112
    %1417 = vmatprep.subr.bf16.mxu0 %v1117
    %1418 = vmatpush1.bf16.msra.mxu0 %v1116
    %1419 = vmatprep.subr.bf16.mxu0 %v1121
    %1420 = vmatpush1.bf16.msra.mxu0 %v1120
    %1421 = vmatprep.subr.bf16.mxu0 %v1125
    %1422 = vmatpush1.bf16.msra.mxu0 %v1124
    %1423 = vmatprep.subr.bf16.mxu0 %v1129
    %1424 = vmatpush1.bf16.msra.mxu0 %v1128
    %1425 = vmatprep.subr.bf16.mxu0 %v1133
    %1426 = vmatpush1.bf16.msra.mxu0 %v1132
    %1427 = vmatprep.subr.bf16.mxu0 %v1137
    %1428 = vmatpush1.bf16.msra.mxu0 %v1136
    %1429 = vmatprep.subr.bf16.mxu0 %v1141
    %1430 = vmatpush1.bf16.msra.mxu0 %v1140
    %1431 = vmatprep.subr.bf16.mxu0 %v1145
    %1432 = vmatpush1.bf16.msra.mxu0 %v1144
    %1433 = vmatprep.subr.bf16.mxu0 %v1149
    %1434 = vmatpush1.bf16.msra.mxu0 %v1148
    %1435 = vmatprep.subr.bf16.mxu0 %v1153
    %1436 = vmatpush1.bf16.msra.mxu0 %v1152
    %1437 = vmatprep.mubr.bf16.mxu0 %v491
    %1438 = vmatmul.mubr.bf16.gmra.mrb[0].mxu0 %v490
    %v1439 = vpop.f32.mrb[0].mxu0
    %v1440 = vadd.f32 %v1399, %v1439
    %v1441 = vpop.f32.mrb[0].mxu0
    %v1442 = vadd.f32 %v1401, %v1441
    %v1443 = vpop.f32.mrb[0].mxu0
    %v1444 = vpop.f32.mrb[0].mxu0
    %1445 = vdwg.mxu0
    %v1446 = vmax.f32 %v1358, 0.0
    %v1447 = vmax.f32 %v1360, 0.0
    %v1448 = vmax.f32 %v1440, 0.0
    %v1449 = vmax.f32 %v1442, 0.0
    %v1450 = vpack.c.bf16 %v1446, %v1446
    %v1451 = vpack.c.bf16 %v1447, %v1447
    %v1452 = vpack.c.bf16 %v1448, %v1448
    %v1453 = vpack.c.bf16 %v1449, %v1449
    %v1454 = vld [vmem:[#allocation8] sm:$0xf]
    %v1455 = vld [vmem:[#allocation8 + $0x4] sm:$0xf]
    %v1456 = vld [vmem:[#allocation8 + $0x8] sm:$0xf]
    %v1457 = vld [vmem:[#allocation8 + $0xc] sm:$0xf]
    %v1458 = vld [vmem:[#allocation8 + $0x10] sm:$0xf]
    %v1459 = vld [vmem:[#allocation8 + $0x14] sm:$0xf]
    %v1460 = vld [vmem:[#allocation8 + $0x18] sm:$0xf]
    %v1461 = vld [vmem:[#allocation8 + $0x1c] sm:$0xf]
    %v1462 = vld [vmem:[#allocation8 + $0x20] sm:$0xf]
    %v1463 = vld [vmem:[#allocation8 + $0x24] sm:$0xf]
    %v1464 = vld [vmem:[#allocation8 + $0x28] sm:$0xf]
    %v1465 = vld [vmem:[#allocation8 + $0x2c] sm:$0xf]
    %v1466 = vld [vmem:[#allocation8 + $0x30] sm:$0xf]
    %v1467 = vld [vmem:[#allocation8 + $0x34] sm:$0xf]
    %v1468 = vld [vmem:[#allocation8 + $0x38] sm:$0xf]
    %v1469 = vld [vmem:[#allocation8 + $0x3c] sm:$0xf]
    %v1470 = vld [vmem:[#allocation8 + $0x40] sm:$0xf]
    %v1471 = vld [vmem:[#allocation8 + $0x44] sm:$0xf]
    %v1472 = vld [vmem:[#allocation8 + $0x48] sm:$0xf]
    %v1473 = vld [vmem:[#allocation8 + $0x4c] sm:$0xf]
    %v1474 = vld [vmem:[#allocation8 + $0x50] sm:$0xf]
    %v1475 = vld [vmem:[#allocation8 + $0x54] sm:$0xf]
    %v1476 = vld [vmem:[#allocation8 + $0x58] sm:$0xf]
    %v1477 = vld [vmem:[#allocation8 + $0x5c] sm:$0xf]
    %v1478 = vld [vmem:[#allocation8 + $0x60] sm:$0xf]
    %v1479 = vld [vmem:[#allocation8 + $0x64] sm:$0xf]
    %v1480 = vld [vmem:[#allocation8 + $0x68] sm:$0xf]
    %v1481 = vld [vmem:[#allocation8 + $0x6c] sm:$0xf]
    %v1482 = vld [vmem:[#allocation8 + $0x70] sm:$0xf]
    %v1483 = vld [vmem:[#allocation8 + $0x74] sm:$0xf]
    %v1484 = vld [vmem:[#allocation8 + $0x78] sm:$0xf]
    %v1485 = vld [vmem:[#allocation8 + $0x7c] sm:$0xf]
    %v1486 = vld [vmem:[#allocation8 + $0x80] sm:$0xf]
    %v1487 = vld [vmem:[#allocation8 + $0x84] sm:$0xf]
    %v1488 = vld [vmem:[#allocation8 + $0x88] sm:$0xf]
    %v1489 = vld [vmem:[#allocation8 + $0x8c] sm:$0xf]
    %v1490 = vld [vmem:[#allocation8 + $0x90] sm:$0xf]
    %v1491 = vld [vmem:[#allocation8 + $0x94] sm:$0xf]
    %v1492 = vld [vmem:[#allocation8 + $0x98] sm:$0xf]
    %v1493 = vld [vmem:[#allocation8 + $0x9c] sm:$0xf]
    %v1494 = vld [vmem:[#allocation8 + $0xa0] sm:$0xf]
    %v1495 = vld [vmem:[#allocation8 + $0xa4] sm:$0xf]
    %v1496 = vld [vmem:[#allocation8 + $0xa8] sm:$0xf]
    %v1497 = vld [vmem:[#allocation8 + $0xac] sm:$0xf]
    %v1498 = vld [vmem:[#allocation8 + $0xb0] sm:$0xf]
    %v1499 = vld [vmem:[#allocation8 + $0xb4] sm:$0xf]
    %v1500 = vld [vmem:[#allocation8 + $0xb8] sm:$0xf]
    %v1501 = vld [vmem:[#allocation8 + $0xbc] sm:$0xf]
    %v1502 = vld [vmem:[#allocation8 + $0xc0] sm:$0xf]
    %v1503 = vld [vmem:[#allocation8 + $0xc4] sm:$0xf]
    %v1504 = vld [vmem:[#allocation8 + $0xc8] sm:$0xf]
    %v1505 = vld [vmem:[#allocation8 + $0xcc] sm:$0xf]
    %v1506 = vld [vmem:[#allocation8 + $0xd0] sm:$0xf]
    %v1507 = vld [vmem:[#allocation8 + $0xd4] sm:$0xf]
    %v1508 = vld [vmem:[#allocation8 + $0xd8] sm:$0xf]
    %v1509 = vld [vmem:[#allocation8 + $0xdc] sm:$0xf]
    %v1510 = vld [vmem:[#allocation8 + $0xe0] sm:$0xf]
    %v1511 = vld [vmem:[#allocation8 + $0xe4] sm:$0xf]
    %v1512 = vld [vmem:[#allocation8 + $0xe8] sm:$0xf]
    %v1513 = vld [vmem:[#allocation8 + $0xec] sm:$0xf]
    %v1514 = vld [vmem:[#allocation8 + $0xf0] sm:$0xf]
    %v1515 = vld [vmem:[#allocation8 + $0xf4] sm:$0xf]
    %v1516 = vld [vmem:[#allocation8 + $0xf8] sm:$0xf]
    %v1517 = vld [vmem:[#allocation8 + $0xfc] sm:$0xf]
    %v1518 = vld [vmem:[%s6] sm:$0x1]
    %v1520 = vlaneseq
    %v1521 = vshrl.u32 %v1520, 7
    %v1522 = vsub.s32 0, %v1521
    %v1523 = vrot.slane %v1518, %v1522
    %v1589 = vunpack.c.l.b16 %v1454
    %v1590 = vunpack.c.l.b16 %v1455
    %v1591 = vunpack.c.l.b16 %v1456
    %v1592 = vunpack.c.l.b16 %v1457
    %v1593 = vunpack.c.l.b16 %v1458
    %v1594 = vunpack.c.l.b16 %v1459
    %v1595 = vunpack.c.l.b16 %v1460
    %v1596 = vunpack.c.l.b16 %v1461
    %v1597 = vunpack.c.l.b16 %v1462
    %v1598 = vunpack.c.l.b16 %v1463
    %v1599 = vunpack.c.l.b16 %v1464
    %v1600 = vunpack.c.l.b16 %v1465
    %v1601 = vunpack.c.l.b16 %v1466
    %v1602 = vunpack.c.l.b16 %v1467
    %v1603 = vunpack.c.l.b16 %v1468
    %v1604 = vunpack.c.l.b16 %v1469
    %v1605 = vunpack.c.l.b16 %v1470
    %v1606 = vunpack.c.l.b16 %v1471
    %v1607 = vunpack.c.l.b16 %v1472
    %v1608 = vunpack.c.l.b16 %v1473
    %v1609 = vunpack.c.l.b16 %v1474
    %v1610 = vunpack.c.l.b16 %v1475
    %v1611 = vunpack.c.l.b16 %v1476
    %v1612 = vunpack.c.l.b16 %v1477
    %v1613 = vunpack.c.l.b16 %v1478
    %v1614 = vunpack.c.l.b16 %v1479
    %v1615 = vunpack.c.l.b16 %v1480
    %v1616 = vunpack.c.l.b16 %v1481
    %v1617 = vunpack.c.l.b16 %v1482
    %v1618 = vunpack.c.l.b16 %v1483
    %v1619 = vunpack.c.l.b16 %v1484
    %v1620 = vunpack.c.l.b16 %v1485
    %v1621 = vunpack.c.l.b16 %v1486
    %v1622 = vunpack.c.l.b16 %v1487
    %v1623 = vunpack.c.l.b16 %v1488
    %v1624 = vunpack.c.l.b16 %v1489
    %v1625 = vunpack.c.l.b16 %v1490
    %v1626 = vunpack.c.l.b16 %v1491
    %v1627 = vunpack.c.l.b16 %v1492
    %v1628 = vunpack.c.l.b16 %v1493
    %v1629 = vunpack.c.l.b16 %v1494
    %v1630 = vunpack.c.l.b16 %v1495
    %v1631 = vunpack.c.l.b16 %v1496
    %v1632 = vunpack.c.l.b16 %v1497
    %v1633 = vunpack.c.l.b16 %v1498
    %v1634 = vunpack.c.l.b16 %v1499
    %v1635 = vunpack.c.l.b16 %v1500
    %v1636 = vunpack.c.l.b16 %v1501
    %v1637 = vunpack.c.l.b16 %v1502
    %v1638 = vunpack.c.l.b16 %v1503
    %v1639 = vunpack.c.l.b16 %v1504
    %v1640 = vunpack.c.l.b16 %v1505
    %v1641 = vunpack.c.l.b16 %v1506
    %v1642 = vunpack.c.l.b16 %v1507
    %v1643 = vunpack.c.l.b16 %v1508
    %v1644 = vunpack.c.l.b16 %v1509
    %v1645 = vunpack.c.l.b16 %v1510
    %v1646 = vunpack.c.l.b16 %v1511
    %v1647 = vunpack.c.l.b16 %v1512
    %v1648 = vunpack.c.l.b16 %v1513
    %v1649 = vunpack.c.l.b16 %v1514
    %v1650 = vunpack.c.l.b16 %v1515
    %v1651 = vunpack.c.l.b16 %v1516
    %v1652 = vunpack.c.l.b16 %v1517
    %v1653 = vpack.c.b16 %v1590, %v1589
    %v1654 = vpack.c.b16 %v1592, %v1591
    %v1655 = vpack.c.b16 %v1594, %v1593
    %v1656 = vpack.c.b16 %v1596, %v1595
    %v1657 = vpack.c.b16 %v1598, %v1597
    %v1658 = vpack.c.b16 %v1600, %v1599
    %v1659 = vpack.c.b16 %v1602, %v1601
    %v1660 = vpack.c.b16 %v1604, %v1603
    %v1661 = vpack.c.b16 %v1606, %v1605
    %v1662 = vpack.c.b16 %v1608, %v1607
    %v1663 = vpack.c.b16 %v1610, %v1609
    %v1664 = vpack.c.b16 %v1612, %v1611
    %v1665 = vpack.c.b16 %v1614, %v1613
    %v1666 = vpack.c.b16 %v1616, %v1615
    %v1667 = vpack.c.b16 %v1618, %v1617
    %v1668 = vpack.c.b16 %v1620, %v1619
    %v1669 = vpack.c.b16 %v1622, %v1621
    %v1670 = vpack.c.b16 %v1624, %v1623
    %v1671 = vpack.c.b16 %v1626, %v1625
    %v1672 = vpack.c.b16 %v1628, %v1627
    %v1673 = vpack.c.b16 %v1630, %v1629
    %v1674 = vpack.c.b16 %v1632, %v1631
    %v1675 = vpack.c.b16 %v1634, %v1633
    %v1676 = vpack.c.b16 %v1636, %v1635
    %v1677 = vpack.c.b16 %v1638, %v1637
    %v1678 = vpack.c.b16 %v1640, %v1639
    %v1679 = vpack.c.b16 %v1642, %v1641
    %v1680 = vpack.c.b16 %v1644, %v1643
    %v1681 = vpack.c.b16 %v1646, %v1645
    %v1682 = vpack.c.b16 %v1648, %v1647
    %v1683 = vpack.c.b16 %v1650, %v1649
    %v1684 = vpack.c.b16 %v1652, %v1651
    %1717 = vmatprep.subr.bf16.mxu0 0
    %1718 = vmatpush1.bf16.msra.mxu0 %v1653
    %1719 = vmatprep.subr.bf16.mxu0 0
    %1720 = vmatpush1.bf16.msra.mxu0 %v1654
    %1721 = vmatprep.subr.bf16.mxu0 0
    %1722 = vmatpush1.bf16.msra.mxu0 %v1655
    %1723 = vmatprep.subr.bf16.mxu0 0
    %1724 = vmatpush1.bf16.msra.mxu0 %v1656
    %1725 = vmatprep.subr.bf16.mxu0 0
    %1726 = vmatpush1.bf16.msra.mxu0 %v1657
    %1727 = vmatprep.subr.bf16.mxu0 0
    %1728 = vmatpush1.bf16.msra.mxu0 %v1658
    %1729 = vmatprep.subr.bf16.mxu0 0
    %1730 = vmatpush1.bf16.msra.mxu0 %v1659
    %1731 = vmatprep.subr.bf16.mxu0 0
    %1732 = vmatpush1.bf16.msra.mxu0 %v1660
    %1733 = vmatprep.subr.bf16.mxu0 0
    %1734 = vmatpush1.bf16.msra.mxu0 %v1661
    %1735 = vmatprep.subr.bf16.mxu0 0
    %1736 = vmatpush1.bf16.msra.mxu0 %v1662
    %1737 = vmatprep.subr.bf16.mxu0 0
    %1738 = vmatpush1.bf16.msra.mxu0 %v1663
    %1739 = vmatprep.subr.bf16.mxu0 0
    %1740 = vmatpush1.bf16.msra.mxu0 %v1664
    %1741 = vmatprep.subr.bf16.mxu0 0
    %1742 = vmatpush1.bf16.msra.mxu0 %v1665
    %1743 = vmatprep.subr.bf16.mxu0 0
    %1744 = vmatpush1.bf16.msra.mxu0 %v1666
    %1745 = vmatprep.subr.bf16.mxu0 0
    %1746 = vmatpush1.bf16.msra.mxu0 %v1667
    %1747 = vmatprep.subr.bf16.mxu0 0
    %1748 = vmatpush1.bf16.msra.mxu0 %v1668
    %1749 = vmatprep.mubr.bf16.mxu0 %v1451
    %1750 = vmatmul.mubr.bf16.gmra.mrb[0].mxu0 %v1450
    %v1751 = vpop.f32.mrb[0].mxu0
    %v1752 = vadd.f32 %v1523, %v1751
    %v1753 = vpop.f32.mrb[0].mxu0
    %v1754 = vpop.f32.mrb[0].mxu0
    %v1755 = vpop.f32.mrb[0].mxu0
    %1756 = vdwg.mxu0
    %1757 = vmatprep.subr.bf16.mxu0 0
    %1758 = vmatpush1.bf16.msra.mxu0 %v1669
    %1759 = vmatprep.subr.bf16.mxu0 0
    %1760 = vmatpush1.bf16.msra.mxu0 %v1670
    %1761 = vmatprep.subr.bf16.mxu0 0
    %1762 = vmatpush1.bf16.msra.mxu0 %v1671
    %1763 = vmatprep.subr.bf16.mxu0 0
    %1764 = vmatpush1.bf16.msra.mxu0 %v1672
    %1765 = vmatprep.subr.bf16.mxu0 0
    %1766 = vmatpush1.bf16.msra.mxu0 %v1673
    %1767 = vmatprep.subr.bf16.mxu0 0
    %1768 = vmatpush1.bf16.msra.mxu0 %v1674
    %1769 = vmatprep.subr.bf16.mxu0 0
    %1770 = vmatpush1.bf16.msra.mxu0 %v1675
    %1771 = vmatprep.subr.bf16.mxu0 0
    %1772 = vmatpush1.bf16.msra.mxu0 %v1676
    %1773 = vmatprep.subr.bf16.mxu0 0
    %1774 = vmatpush1.bf16.msra.mxu0 %v1677
    %1775 = vmatprep.subr.bf16.mxu0 0
    %1776 = vmatpush1.bf16.msra.mxu0 %v1678
    %1777 = vmatprep.subr.bf16.mxu0 0
    %1778 = vmatpush1.bf16.msra.mxu0 %v1679
    %1779 = vmatprep.subr.bf16.mxu0 0
    %1780 = vmatpush1.bf16.msra.mxu0 %v1680
    %1781 = vmatprep.subr.bf16.mxu0 0
    %1782 = vmatpush1.bf16.msra.mxu0 %v1681
    %1783 = vmatprep.subr.bf16.mxu0 0
    %1784 = vmatpush1.bf16.msra.mxu0 %v1682
    %1785 = vmatprep.subr.bf16.mxu0 0
    %1786 = vmatpush1.bf16.msra.mxu0 %v1683
    %1787 = vmatprep.subr.bf16.mxu0 0
    %1788 = vmatpush1.bf16.msra.mxu0 %v1684
    %1789 = vmatprep.mubr.bf16.mxu0 %v1453
    %1790 = vmatmul.mubr.bf16.gmra.mrb[0].mxu0 %v1452
    %v1791 = vpop.f32.mrb[0].mxu0
    %v1792 = vadd.f32 %v1752, %v1791
    %v1793 = vpop.f32.mrb[0].mxu0
    %v1794 = vpop.f32.mrb[0].mxu0
    %v1795 = vpop.f32.mrb[0].mxu0
    %1796 = vdwg.mxu0
    %1797 = vst [vmem:[#allocation10] sm:$0xff] %v1792
    // Predicated region
    $region46: #{tpu_custom_call.1} parent=1 // pred_check
      _
    $region47: #{tpu_custom_call.1} parent=1 // pred_check_branch
      %1799 = sbr.rel (0) target = $region49
    $region48: #{tpu_custom_call.1} parent=1 // pred_region
      %s1801 = ssub.s32 128, 128
      %1802 = vsyncadd [#allocation4], %s1801
      %s1804 = sshll.u32 [#allocation10], 4
      %s1805 = int_to_ptr.vmem [resolvable:$true] %s1804
      %1807 = dma.vmem_to_hbm [thread:$0]  %s1805, 128, %s7, [#allocation4]
    $region49: #{tpu_custom_call.1} parent=1 // pred_fallthru
      _
    // Predicated region
    $region50: #{tpu_custom_call.1} parent=1 // pred_check
      _
    $region51: #{tpu_custom_call.1} parent=1 // pred_check_branch
      %1809 = sbr.rel (0) target = $region53
    $region52: #{tpu_custom_call.1} parent=1 // pred_region
      %1810 = dma.done [#allocation4], 128
    $region53: #{tpu_custom_call.1} parent=1 // pred_fallthru
      _
    %1811 = vsyncpa [#allocation3], 1
    %1812 = vsyncpa [#allocation6], 1
    %1813 = vsyncpa [#allocation9], 1
    %1814 = vsyncpa [#allocation4], 1

</llo_original>
